<compile_context>
chip_gen: v6e
topology: v6e:2x2x1
jax: 0.10.0
libtpu: 0.0.40
codegen_flags: <defaults>
</compile_context>

<pallas_src>
import functools

import jax
import jax.numpy as jnp
from jax.experimental import pallas as pl
from jax.experimental.pallas import tpu as pltpu


def _round_up(v, m):
    return (v + m - 1) // m * m


def _layernorm(y, gamma, beta, inv_n, eps=1e-5):
    """One-pass LayerNorm over the last axis.

    `y` may be zero-padded along the last axis; `inv_n` is 1/true_width, so the statistics
    match an unpadded LayerNorm (biased variance, like nn.LayerNorm).  Padded gamma/beta are
    zero, so padded output columns are exactly 0.
    """
    s = jnp.sum(y, axis=-1, keepdims=True)
    ss = jnp.sum(y * y, axis=-1, keepdims=True)
    mu = s * inv_n
    var = ss * inv_n - mu * mu
    return (y - mu) * jax.lax.rsqrt(var + eps) * gamma + beta


def transformer_block_kernel(xkv_ref,
                             wqkv_ref, bqkv_ref,
                             wo_ref, bo_ref,
                             g1_ref, be1_ref,
                             w1_ref, b1_ref, w2_ref, b2_ref,
                             g2_ref, be2_ref,
                             o_ref,
                             q_s, k_s, v_s,
                             *, tq, inv_e, inv_sqrt_h):
    f32 = jnp.float32
    bf16 = jnp.bfloat16
    Hp = k_s.shape[-1]

    # ---- fused QKV projection, hoisted: runs once per batch element (qt == 0) ----------------
    # Single (T, Ep) x (Ep, 3*Hp) matmul keeps the 256-wide MXU (v6e/v7x) fully occupied and
    # avoids recomputing K/V for every q tile.  Results persist in VMEM scratch across qt steps.
    @pl.when(pl.program_id(1) == 0)
    def _():
        x_kv = xkv_ref[...]                                              # (T, Ep) bf16
        qkv = jnp.dot(x_kv, wqkv_ref[...],
                      preferred_element_type=f32) + bqkv_ref[...]        # (T, 3*Hp) f32
        # 1/sqrt(head_size) folded into Q here (O(T*Hp)) instead of scaling (tq, T) scores.
        q_s[...] = (qkv[:, :Hp] * inv_sqrt_h).astype(bf16)
        k_s[...] = qkv[:, Hp:2 * Hp].astype(bf16)
        v_s[...] = qkv[:, 2 * Hp:].astype(bf16)

    # ---- per-q-tile work ----------------------------------------------------------------------
    start = pl.multiple_of(pl.program_id(1) * tq, 8)
    x_q = xkv_ref[pl.ds(start, tq), :]          # (tq, Ep) bf16 residual rows (subset of KV block)
    q = q_s[pl.ds(start, tq), :]                # (tq, Hp) bf16, pre-scaled

    # scores = q @ k^T without materializing a transpose (contract the last dims).
    scores = jax.lax.dot_general(q, k_s[...], (((1,), (1,)), ((), ())),
                                 preferred_element_type=f32)             # (tq, T)

    # softmax in f32 with deferred normalization.
    scores = scores - jnp.max(scores, axis=-1, keepdims=True)
    p = jnp.exp(scores)
    denom = jnp.sum(p, axis=-1, keepdims=True)                           # (tq, 1)

    attn = jnp.dot(p.astype(bf16), v_s[...], preferred_element_type=f32)  # (tq, Hp)
    attn = attn * pl.reciprocal(denom, approx=True)                       # EUP slot, VALU stays free

    attn_out = (jnp.dot(attn.astype(bf16), wo_ref[...],
                        preferred_element_type=f32) + bo_ref[...])       # (tq, Ep)

    # ---- residual + LayerNorm1 (f32) ----
    h = _layernorm(x_q.astype(f32) + attn_out, g1_ref[...], be1_ref[...], inv_e)

    # ---- FeedForward ----
    f = jnp.dot(h.astype(bf16), w1_ref[...], preferred_element_type=f32) + b1_ref[...]
    f = jnp.maximum(f, 0.0)
    f = jnp.dot(f.astype(bf16), w2_ref[...], preferred_element_type=f32) + b2_ref[...]

    # ---- residual + LayerNorm2 ----
    out = _layernorm(h + f, g2_ref[...], be2_ref[...], inv_e)
    o_ref[...] = out.astype(o_ref.dtype)


def prepare_params(params):
    """One-time padding + bf16 conversion of the TransformerBlock parameters.

    Hoisted out of the per-call path so the full-HBM-pass pad/cast of w1/w2 is not re-executed
    every forward call.  The fused QKV weight is re-packed so each of Q/K/V owns its own
    128-lane chunk (aligned, free slicing in the kernel).
    """
    (wqkv, bqkv, wo, bo, g1, be1, w1, b1, w2, b2, g2, be2) = params
    E = wqkv.shape[0]
    H = wqkv.shape[1] // 3
    F = w1.shape[1]
    Ep, Hp, Fp = _round_up(E, 128), _round_up(H, 128), _round_up(F, 128)

    def pad2(a, r, c):
        return jnp.pad(a, ((0, r - a.shape[0]), (0, c - a.shape[1])))

    wq, wk, wv = wqkv[:, :H], wqkv[:, H:2 * H], wqkv[:, 2 * H:]
    bq, bk, bv = bqkv[:, :H], bqkv[:, H:2 * H], bqkv[:, 2 * H:]

    wqkv_p = jnp.concatenate([pad2(wq, Ep, Hp), pad2(wk, Ep, Hp), pad2(wv, Ep, Hp)],
                             axis=1).astype(jnp.bfloat16)                # (Ep, 3*Hp)
    bqkv_p = jnp.concatenate([pad2(bq, 1, Hp), pad2(bk, 1, Hp), pad2(bv, 1, Hp)],
                             axis=1).astype(jnp.float32)                 # (1, 3*Hp)

    kparams = (wqkv_p, bqkv_p,
               pad2(wo, Hp, Ep).astype(jnp.bfloat16), pad2(bo, 1, Ep).astype(jnp.float32),
               pad2(g1, 1, Ep).astype(jnp.float32), pad2(be1, 1, Ep).astype(jnp.float32),
               pad2(w1, Ep, Fp).astype(jnp.bfloat16), pad2(b1, 1, Fp).astype(jnp.float32),
               pad2(w2, Fp, Ep).astype(jnp.bfloat16), pad2(b2, 1, Ep).astype(jnp.float32),
               pad2(g2, 1, Ep).astype(jnp.float32), pad2(be2, 1, Ep).astype(jnp.float32))
    kparams = jax.tree_util.tree_map(jax.block_until_ready, kparams)
    return kparams, (E, H, Ep, Hp, Fp)


def _derive_vmem_limit(T, Ep, Hp, Fp, tq):
    """Shape-derived VMEM budget (bytes) with headroom, clamped to the chip's capacity."""
    bf, f4 = 2, 4
    weights = bf * (Ep * 3 * Hp + Hp * Ep + Ep * Fp + Fp * Ep)       # single-buffered bf16 weights
    vectors = f4 * (3 * Hp + 6 * Ep + Fp)                            # biases / gamma / beta
    x_block = 2 * bf * T * Ep                                        # double-buffered seq block
    out_blk = 2 * f4 * tq * Ep                                       # double-buffered output tile
    scratch = bf * 3 * T * Hp                                        # Q/K/V scratch
    live = f4 * (T * 3 * Hp + tq * T + tq * Fp + 4 * tq * Ep)        # rough f32 intermediates
    need = weights + vectors + x_block + out_blk + scratch + live
    try:
        cap = pltpu.get_tpu_info().vmem_capacity_bytes
    except Exception:
        cap = 64 * 1024 * 1024                                       # v7x worst case
    headroom = 16 * 1024 * 1024
    return int(max(32 * 1024 * 1024, min(cap - headroom, need + headroom)))


def transformer_block(x, prepared, *, q_tile=256):
    # NOTE: on v5e/v6e (128 MiB VMEM) a larger q_tile (512 / T) amortizes per-step overhead;
    # on v7x (64 MiB) keep it at <=256 (or 128) so scores/FFN intermediates stay small.
    kparams, (E, H, Ep, Hp, Fp) = prepared
    B, T, E_in = x.shape
    assert E_in == E, "input embedding dim must match the parameters"

    tq = min(T, q_tile)
    assert T % tq == 0, "sequence length must be divisible by the q tile"
    assert tq == T or tq % 8 == 0, "q tile must be a multiple of 8 sublanes"

    xp = jnp.pad(x, ((0, 0), (0, 0), (0, Ep - E))).astype(jnp.bfloat16)

    kernel = functools.partial(transformer_block_kernel,
                               tq=tq, inv_e=1.0 / E, inv_sqrt_h=1.0 / (H ** 0.5))

    # Grid-invariant weight/bias blocks: DMA'd once, single-buffered (no pipelining needed).
    def const_spec(a):
        nd = a.ndim
        return pl.BlockSpec(a.shape, lambda b, qt: (0,) * nd,
                            pipeline_mode=pl.Buffered(1))

    out = pl.pallas_call(
        kernel,
        out_shape=jax.ShapeDtypeStruct((B, T, Ep), jnp.float32),
        grid_spec=pltpu.PrefetchScalarGridSpec(
            num_scalar_prefetch=0,
            grid=(B, T // tq),
            in_specs=[pl.BlockSpec((pl.Squeezed(), T, Ep), lambda b, qt: (b, 0, 0))]
                     + [const_spec(p) for p in kparams],
            out_specs=pl.BlockSpec((pl.Squeezed(), tq, Ep), lambda b, qt: (b, qt, 0)),
            scratch_shapes=[pltpu.VMEM((T, Hp), jnp.bfloat16),   # Q (pre-scaled)
                            pltpu.VMEM((T, Hp), jnp.bfloat16),   # K
                            pltpu.VMEM((T, Hp), jnp.bfloat16)],  # V
        ),
        # qt must be "arbitrary": the qt==0 K/V init must not be megacore-split away.
        compiler_params=pltpu.CompilerParams(
            dimension_semantics=("parallel", "arbitrary"),
            vmem_limit_bytes=_derive_vmem_limit(T, Ep, Hp, Fp, tq)),
    )(xp, *kparams)

    return out[:, :, :E] if Ep != E else out


def init_params(key, emb_size, head_size):
    """Deterministic init mimicking PyTorch Linear defaults (uniform +-1/sqrt(fan_in))."""
    ks = jax.random.split(key, 8)

    def lin(k, fan_in, fan_out):
        bound = 1.0 / (fan_in ** 0.5)
        kw, kb = jax.random.split(k)
        w = jax.random.uniform(kw, (fan_in, fan_out), jnp.float32, -bound, bound)
        b = jax.random.uniform(kb, (1, fan_out), jnp.float32, -bound, bound)
        return w, b

    wqkv, bqkv = lin(ks[0], emb_size, 3 * head_size)
    wo, bo = lin(ks[1], head_size, emb_size)
    w1, b1 = lin(ks[2], emb_size, 4 * emb_size)
    w2, b2 = lin(ks[3], 4 * emb_size, emb_size)
    g1 = jnp.ones((1, emb_size), jnp.float32)
    be1 = jnp.zeros((1, emb_size), jnp.float32)
    g2 = jnp.ones((1, emb_size), jnp.float32)
    be2 = jnp.zeros((1, emb_size), jnp.float32)
    return (wqkv, bqkv, wo, bo, g1, be1, w1, b1, w2, b2, g2, be2)


def reference(x, params):
    (wqkv, bqkv, wo, bo, g1, be1, w1, b1, w2, b2, g2, be2) = params
    H = wqkv.shape[1] // 3

    def ln(y, g, b, eps=1e-5):
        mu = jnp.mean(y, axis=-1, keepdims=True)
        var = jnp.mean((y - mu) ** 2, axis=-1, keepdims=True)
        return (y - mu) / jnp.sqrt(var + eps) * g + b

    qkv = x @ wqkv + bqkv
    q, k, v = qkv[..., :H], qkv[..., H:2 * H], qkv[..., 2 * H:]
    s = jnp.einsum("btd,bsd->bts", q, k) / (H ** 0.5)
    p = jax.nn.softmax(s, axis=-1)
    a = jnp.einsum("bts,bsd->btd", p, v) @ wo + bo
    h = ln(x + a, g1, be1)
    f = jnp.maximum(h @ w1 + b1, 0.0) @ w2 + b2
    return ln(h + f, g2, be2)


if __name__ == "__main__":
    B, T, E, HS = 2, 8, 32, 16
    key = jax.random.PRNGKey(0)
    kx, kp = jax.random.split(key)
    x = jax.random.normal(kx, (B, T, E), jnp.float32)
    params = init_params(kp, E, HS)

    prepared = prepare_params(params)       # one-time pad + bf16 conversion (off the hot path)

    out = jax.block_until_ready(transformer_block(x, prepared))
    ref = reference(x, params)

    assert out.shape == (B, T, E)
    # bf16 MXU operands + approx softmax reciprocal -> loosened tolerance vs f32 reference.
    assert jnp.allclose(out, ref, rtol=5e-2, atol=5e-2), "mismatch vs reference"
    print("KERNEL_OK")
</pallas_src>

<mosaic_0001>
module attributes {stable_mosaic.version = 11 : i64} {
  func.func @transformer_block_kernel(%arg0: i32, %arg1: i32, %arg2: memref<1x8x128xbf16, #tpu.memory_space<vmem>>, %arg3: memref<128x384xbf16, #tpu.memory_space<vmem>>, %arg4: memref<1x384xf32, #tpu.memory_space<vmem>>, %arg5: memref<128x128xbf16, #tpu.memory_space<vmem>>, %arg6: memref<1x128xf32, #tpu.memory_space<vmem>>, %arg7: memref<1x128xf32, #tpu.memory_space<vmem>>, %arg8: memref<1x128xf32, #tpu.memory_space<vmem>>, %arg9: memref<128x128xbf16, #tpu.memory_space<vmem>>, %arg10: memref<1x128xf32, #tpu.memory_space<vmem>>, %arg11: memref<128x128xbf16, #tpu.memory_space<vmem>>, %arg12: memref<1x128xf32, #tpu.memory_space<vmem>>, %arg13: memref<1x128xf32, #tpu.memory_space<vmem>>, %arg14: memref<1x128xf32, #tpu.memory_space<vmem>>, %arg15: memref<1x8x128xf32, #tpu.memory_space<vmem>>, %arg16: memref<8x128xbf16, #tpu.memory_space<vmem>>, %arg17: memref<8x128xbf16, #tpu.memory_space<vmem>>, %arg18: memref<8x128xbf16, #tpu.memory_space<vmem>>) attributes {dimension_semantics = [#tpu.dimension_semantics<parallel>, #tpu.dimension_semantics<arbitrary>], iteration_bounds = array<i64: 2, 1>, scalar_prefetch = 0 : i64, scratch_operands = 3 : i64, tpu.core_type = #tpu.core_type<tc>, window_params = [{transform_indices = @transform_0, window_bounds = array<i64: 1, 8, 128>}, {pipeline_mode = #tpu.pipeline_mode<synchronous>, transform_indices = @transform_1, window_bounds = array<i64: 128, 384>}, {pipeline_mode = #tpu.pipeline_mode<synchronous>, transform_indices = @transform_2, window_bounds = array<i64: 1, 384>}, {pipeline_mode = #tpu.pipeline_mode<synchronous>, transform_indices = @transform_3, window_bounds = array<i64: 128, 128>}, {pipeline_mode = #tpu.pipeline_mode<synchronous>, transform_indices = @transform_4, window_bounds = array<i64: 1, 128>}, {pipeline_mode = #tpu.pipeline_mode<synchronous>, transform_indices = @transform_5, window_bounds = array<i64: 1, 128>}, {pipeline_mode = #tpu.pipeline_mode<synchronous>, transform_indices = @transform_6, window_bounds = array<i64: 1, 128>}, {pipeline_mode = #tpu.pipeline_mode<synchronous>, transform_indices = @transform_7, window_bounds = array<i64: 128, 128>}, {pipeline_mode = #tpu.pipeline_mode<synchronous>, transform_indices = @transform_8, window_bounds = array<i64: 1, 128>}, {pipeline_mode = #tpu.pipeline_mode<synchronous>, transform_indices = @transform_9, window_bounds = array<i64: 128, 128>}, {pipeline_mode = #tpu.pipeline_mode<synchronous>, transform_indices = @transform_10, window_bounds = array<i64: 1, 128>}, {pipeline_mode = #tpu.pipeline_mode<synchronous>, transform_indices = @transform_11, window_bounds = array<i64: 1, 128>}, {pipeline_mode = #tpu.pipeline_mode<synchronous>, transform_indices = @transform_12, window_bounds = array<i64: 1, 128>}, {transform_indices = @transform_13, window_bounds = array<i64: 1, 8, 128>}]} {
    %c0_i32 = arith.constant 0 : i32
    %0 = arith.cmpi eq, %arg1, %c0_i32 : i32
    %1 = arith.extui %0 : i1 to i32
    %c0_i32_0 = arith.constant 0 : i32
    %2 = arith.cmpi ne, %1, %c0_i32_0 : i32
    scf.if %2 {
      %c0_47 = arith.constant 0 : index
      %c0_48 = arith.constant 0 : index
      %c0_49 = arith.constant 0 : index
      %99 = vector.load %arg2[%c0_47, %c0_48, %c0_49] : memref<1x8x128xbf16, #tpu.memory_space<vmem>>, vector<1x8x128xbf16>
      %100 = vector.shape_cast %99 : vector<1x8x128xbf16> to vector<8x128xbf16>
      %c0_50 = arith.constant 0 : index
      %c0_51 = arith.constant 0 : index
      %101 = vector.load %arg3[%c0_50, %c0_51] : memref<128x384xbf16, #tpu.memory_space<vmem>>, vector<128x384xbf16>
      %cst_52 = arith.constant dense<0.000000e+00> : vector<8x384xf32>
      %102 = tpu.matmul %100, %101, %cst_52 {dimension_numbers = #tpu.dot_dimension_numbers<[1], [0], [0], [1], [0, 0, 1, 1], [], []>} : vector<8x128xbf16>, vector<128x384xbf16>, vector<8x384xf32> -> vector<8x384xf32>
      %c0_53 = arith.constant 0 : index
      %c0_54 = arith.constant 0 : index
      %103 = vector.load %arg4[%c0_53, %c0_54] : memref<1x384xf32, #tpu.memory_space<vmem>>, vector<1x384xf32>
      %104 = vector.broadcast %103 : vector<1x384xf32> to vector<8x384xf32>
      %105 = arith.addf %102, %104 : vector<8x384xf32>
      %106 = vector.extract_strided_slice %105 {offsets = [0, 0], sizes = [8, 128], strides = [1, 1]} : vector<8x384xf32> to vector<8x128xf32>
      %cst_55 = arith.constant 2.500000e-01 : f32
      %107 = vector.broadcast %cst_55 : f32 to vector<8x128xf32>
      %108 = arith.mulf %106, %107 : vector<8x128xf32>
      %109 = arith.truncf %108 : vector<8x128xf32> to vector<8x128xbf16>
      %c0_56 = arith.constant 0 : index
      %c0_57 = arith.constant 0 : index
      %110 = vector.load %arg16[%c0_56, %c0_57] : memref<8x128xbf16, #tpu.memory_space<vmem>>, vector<8x128xbf16>
      tpu.vector_store %arg16[%c0_56, %c0_57], %109 {strides = array<i32>} : memref<8x128xbf16, #tpu.memory_space<vmem>>, vector<8x128xbf16>,
      %111 = vector.extract_strided_slice %105 {offsets = [0, 128], sizes = [8, 128], strides = [1, 1]} : vector<8x384xf32> to vector<8x128xf32>
      %112 = arith.truncf %111 : vector<8x128xf32> to vector<8x128xbf16>
      %c0_58 = arith.constant 0 : index
      %c0_59 = arith.constant 0 : index
      %113 = vector.load %arg17[%c0_58, %c0_59] : memref<8x128xbf16, #tpu.memory_space<vmem>>, vector<8x128xbf16>
      tpu.vector_store %arg17[%c0_58, %c0_59], %112 {strides = array<i32>} : memref<8x128xbf16, #tpu.memory_space<vmem>>, vector<8x128xbf16>,
      %114 = vector.extract_strided_slice %105 {offsets = [0, 256], sizes = [8, 128], strides = [1, 1]} : vector<8x384xf32> to vector<8x128xf32>
      %115 = arith.truncf %114 : vector<8x128xf32> to vector<8x128xbf16>
      %c0_60 = arith.constant 0 : index
      %c0_61 = arith.constant 0 : index
      %116 = vector.load %arg18[%c0_60, %c0_61] : memref<8x128xbf16, #tpu.memory_space<vmem>>, vector<8x128xbf16>
      tpu.vector_store %arg18[%c0_60, %c0_61], %115 {strides = array<i32>} : memref<8x128xbf16, #tpu.memory_space<vmem>>, vector<8x128xbf16>,
    } else {
    }
    %c8_i32 = arith.constant 8 : i32
    %3 = arith.muli %arg1, %c8_i32 : i32
    %4 = tpu.assume_multiple %3, 8 : i32
    %c0 = arith.constant 0 : index
    %5 = arith.index_cast %4 : i32 to index
    %c0_1 = arith.constant 0 : index
    %6 = vector.load %arg2[%c0, %5, %c0_1] : memref<1x8x128xbf16, #tpu.memory_space<vmem>>, vector<1x8x128xbf16>
    %7 = vector.shape_cast %6 : vector<1x8x128xbf16> to vector<8x128xbf16>
    %8 = arith.index_cast %4 : i32 to index
    %c0_2 = arith.constant 0 : index
    %9 = vector.load %arg16[%8, %c0_2] : memref<8x128xbf16, #tpu.memory_space<vmem>>, vector<8x128xbf16>
    %c0_3 = arith.constant 0 : index
    %c0_4 = arith.constant 0 : index
    %10 = vector.load %arg17[%c0_3, %c0_4] : memref<8x128xbf16, #tpu.memory_space<vmem>>, vector<8x128xbf16>
    %cst = arith.constant dense<0.000000e+00> : vector<8x8xf32>
    %11 = tpu.matmul %9, %10, %cst {dimension_numbers = #tpu.dot_dimension_numbers<[1], [1], [0], [0], [0, 0, 1, 0], [], []>} : vector<8x128xbf16>, vector<8x128xbf16>, vector<8x8xf32> -> vector<8x8xf32>
    %cst_5 = arith.constant dense<0xFF800000> : vector<8xf32>
    %12 = vector.multi_reduction <maximumf>, %11, %cst_5 [1] : vector<8x8xf32> to vector<8xf32>
    %13 = vector.shape_cast %12 : vector<8xf32> to vector<8x1xf32>
    %14 = vector.broadcast %13 : vector<8x1xf32> to vector<8x8xf32>
    %15 = arith.subf %11, %14 : vector<8x8xf32>
    %16 = math.exp %15 : vector<8x8xf32>
    %cst_6 = arith.constant dense<0.000000e+00> : vector<8xf32>
    %17 = vector.multi_reduction <add>, %16, %cst_6 [1] : vector<8x8xf32> to vector<8xf32>
    %18 = vector.shape_cast %17 : vector<8xf32> to vector<8x1xf32>
    %19 = arith.truncf %16 : vector<8x8xf32> to vector<8x8xbf16>
    %c0_7 = arith.constant 0 : index
    %c0_8 = arith.constant 0 : index
    %20 = vector.load %arg18[%c0_7, %c0_8] : memref<8x128xbf16, #tpu.memory_space<vmem>>, vector<8x128xbf16>
    %cst_9 = arith.constant dense<0.000000e+00> : vector<8x128xf32>
    %21 = tpu.matmul %19, %20, %cst_9 {dimension_numbers = #tpu.dot_dimension_numbers<[1], [0], [0], [1], [0, 0, 1, 1], [], []>} : vector<8x8xbf16>, vector<8x128xbf16>, vector<8x128xf32> -> vector<8x128xf32>
    %22 = tpu.reciprocal %18 {approx = true} : vector<8x1xf32> -> vector<8x1xf32>
    %23 = vector.broadcast %22 : vector<8x1xf32> to vector<8x128xf32>
    %24 = arith.mulf %21, %23 : vector<8x128xf32>
    %25 = arith.truncf %24 : vector<8x128xf32> to vector<8x128xbf16>
    %c0_10 = arith.constant 0 : index
    %c0_11 = arith.constant 0 : index
    %26 = vector.load %arg5[%c0_10, %c0_11] : memref<128x128xbf16, #tpu.memory_space<vmem>>, vector<128x128xbf16>
    %cst_12 = arith.constant dense<0.000000e+00> : vector<8x128xf32>
    %27 = tpu.matmul %25, %26, %cst_12 {dimension_numbers = #tpu.dot_dimension_numbers<[1], [0], [0], [1], [0, 0, 1, 1], [], []>} : vector<8x128xbf16>, vector<128x128xbf16>, vector<8x128xf32> -> vector<8x128xf32>
    %c0_13 = arith.constant 0 : index
    %c0_14 = arith.constant 0 : index
    %28 = vector.load %arg6[%c0_13, %c0_14] : memref<1x128xf32, #tpu.memory_space<vmem>>, vector<1x128xf32>
    %29 = vector.broadcast %28 : vector<1x128xf32> to vector<8x128xf32>
    %30 = arith.addf %27, %29 : vector<8x128xf32>
    %31 = arith.extf %7 : vector<8x128xbf16> to vector<8x128xf32>
    %32 = arith.addf %31, %30 : vector<8x128xf32>
    %c0_15 = arith.constant 0 : index
    %c0_16 = arith.constant 0 : index
    %33 = vector.load %arg7[%c0_15, %c0_16] : memref<1x128xf32, #tpu.memory_space<vmem>>, vector<1x128xf32>
    %c0_17 = arith.constant 0 : index
    %c0_18 = arith.constant 0 : index
    %34 = vector.load %arg8[%c0_17, %c0_18] : memref<1x128xf32, #tpu.memory_space<vmem>>, vector<1x128xf32>
    %cst_19 = arith.constant dense<0.000000e+00> : vector<8xf32>
    %35 = vector.multi_reduction <add>, %32, %cst_19 [1] : vector<8x128xf32> to vector<8xf32>
    %36 = vector.shape_cast %35 : vector<8xf32> to vector<8x1xf32>
    %37 = arith.mulf %32, %32 : vector<8x128xf32>
    %cst_20 = arith.constant dense<0.000000e+00> : vector<8xf32>
    %38 = vector.multi_reduction <add>, %37, %cst_20 [1] : vector<8x128xf32> to vector<8xf32>
    %39 = vector.shape_cast %38 : vector<8xf32> to vector<8x1xf32>
    %cst_21 = arith.constant 3.125000e-02 : f32
    %40 = vector.broadcast %cst_21 : f32 to vector<8x1xf32>
    %41 = arith.mulf %36, %40 : vector<8x1xf32>
    %cst_22 = arith.constant 3.125000e-02 : f32
    %42 = vector.broadcast %cst_22 : f32 to vector<8x1xf32>
    %43 = arith.mulf %39, %42 : vector<8x1xf32>
    %44 = arith.mulf %41, %41 : vector<8x1xf32>
    %45 = arith.subf %43, %44 : vector<8x1xf32>
    %46 = vector.broadcast %41 : vector<8x1xf32> to vector<8x128xf32>
    %47 = arith.subf %32, %46 : vector<8x128xf32>
    %cst_23 = arith.constant 9.99999974E-6 : f32
    %48 = vector.broadcast %cst_23 : f32 to vector<8x1xf32>
    %49 = arith.addf %45, %48 : vector<8x1xf32>
    %50 = math.rsqrt %49 : vector<8x1xf32>
    %51 = vector.broadcast %50 : vector<8x1xf32> to vector<8x128xf32>
    %52 = arith.mulf %47, %51 : vector<8x128xf32>
    %53 = vector.broadcast %33 : vector<1x128xf32> to vector<8x128xf32>
    %54 = arith.mulf %52, %53 : vector<8x128xf32>
    %55 = vector.broadcast %34 : vector<1x128xf32> to vector<8x128xf32>
    %56 = arith.addf %54, %55 : vector<8x128xf32>
    %57 = arith.truncf %56 : vector<8x128xf32> to vector<8x128xbf16>
    %c0_24 = arith.constant 0 : index
    %c0_25 = arith.constant 0 : index
    %58 = vector.load %arg9[%c0_24, %c0_25] : memref<128x128xbf16, #tpu.memory_space<vmem>>, vector<128x128xbf16>
    %cst_26 = arith.constant dense<0.000000e+00> : vector<8x128xf32>
    %59 = tpu.matmul %57, %58, %cst_26 {dimension_numbers = #tpu.dot_dimension_numbers<[1], [0], [0], [1], [0, 0, 1, 1], [], []>} : vector<8x128xbf16>, vector<128x128xbf16>, vector<8x128xf32> -> vector<8x128xf32>
    %c0_27 = arith.constant 0 : index
    %c0_28 = arith.constant 0 : index
    %60 = vector.load %arg10[%c0_27, %c0_28] : memref<1x128xf32, #tpu.memory_space<vmem>>, vector<1x128xf32>
    %61 = vector.broadcast %60 : vector<1x128xf32> to vector<8x128xf32>
    %62 = arith.addf %59, %61 : vector<8x128xf32>
    %cst_29 = arith.constant 0.000000e+00 : f32
    %63 = vector.broadcast %cst_29 : f32 to vector<8x128xf32>
    %64 = arith.maximumf %62, %63 : vector<8x128xf32>
    %65 = arith.truncf %64 : vector<8x128xf32> to vector<8x128xbf16>
    %c0_30 = arith.constant 0 : index
    %c0_31 = arith.constant 0 : index
    %66 = vector.load %arg11[%c0_30, %c0_31] : memref<128x128xbf16, #tpu.memory_space<vmem>>, vector<128x128xbf16>
    %cst_32 = arith.constant dense<0.000000e+00> : vector<8x128xf32>
    %67 = tpu.matmul %65, %66, %cst_32 {dimension_numbers = #tpu.dot_dimension_numbers<[1], [0], [0], [1], [0, 0, 1, 1], [], []>} : vector<8x128xbf16>, vector<128x128xbf16>, vector<8x128xf32> -> vector<8x128xf32>
    %c0_33 = arith.constant 0 : index
    %c0_34 = arith.constant 0 : index
    %68 = vector.load %arg12[%c0_33, %c0_34] : memref<1x128xf32, #tpu.memory_space<vmem>>, vector<1x128xf32>
    %69 = vector.broadcast %68 : vector<1x128xf32> to vector<8x128xf32>
    %70 = arith.addf %67, %69 : vector<8x128xf32>
    %71 = arith.addf %56, %70 : vector<8x128xf32>
    %c0_35 = arith.constant 0 : index
    %c0_36 = arith.constant 0 : index
    %72 = vector.load %arg13[%c0_35, %c0_36] : memref<1x128xf32, #tpu.memory_space<vmem>>, vector<1x128xf32>
    %c0_37 = arith.constant 0 : index
    %c0_38 = arith.constant 0 : index
    %73 = vector.load %arg14[%c0_37, %c0_38] : memref<1x128xf32, #tpu.memory_space<vmem>>, vector<1x128xf32>
    %cst_39 = arith.constant dense<0.000000e+00> : vector<8xf32>
    %74 = vector.multi_reduction <add>, %71, %cst_39 [1] : vector<8x128xf32> to vector<8xf32>
    %75 = vector.shape_cast %74 : vector<8xf32> to vector<8x1xf32>
    %76 = arith.mulf %71, %71 : vector<8x128xf32>
    %cst_40 = arith.constant dense<0.000000e+00> : vector<8xf32>
    %77 = vector.multi_reduction <add>, %76, %cst_40 [1] : vector<8x128xf32> to vector<8xf32>
    %78 = vector.shape_cast %77 : vector<8xf32> to vector<8x1xf32>
    %cst_41 = arith.constant 3.125000e-02 : f32
    %79 = vector.broadcast %cst_41 : f32 to vector<8x1xf32>
    %80 = arith.mulf %75, %79 : vector<8x1xf32>
    %cst_42 = arith.constant 3.125000e-02 : f32
    %81 = vector.broadcast %cst_42 : f32 to vector<8x1xf32>
    %82 = arith.mulf %78, %81 : vector<8x1xf32>
    %83 = arith.mulf %80, %80 : vector<8x1xf32>
    %84 = arith.subf %82, %83 : vector<8x1xf32>
    %85 = vector.broadcast %80 : vector<8x1xf32> to vector<8x128xf32>
    %86 = arith.subf %71, %85 : vector<8x128xf32>
    %cst_43 = arith.constant 9.99999974E-6 : f32
    %87 = vector.broadcast %cst_43 : f32 to vector<8x1xf32>
    %88 = arith.addf %84, %87 : vector<8x1xf32>
    %89 = math.rsqrt %88 : vector<8x1xf32>
    %90 = vector.broadcast %89 : vector<8x1xf32> to vector<8x128xf32>
    %91 = arith.mulf %86, %90 : vector<8x128xf32>
    %92 = vector.broadcast %72 : vector<1x128xf32> to vector<8x128xf32>
    %93 = arith.mulf %91, %92 : vector<8x128xf32>
    %94 = vector.broadcast %73 : vector<1x128xf32> to vector<8x128xf32>
    %95 = arith.addf %93, %94 : vector<8x128xf32>
    %c0_44 = arith.constant 0 : index
    %c0_45 = arith.constant 0 : index
    %c0_46 = arith.constant 0 : index
    %96 = vector.load %arg15[%c0_44, %c0_45, %c0_46] : memref<1x8x128xf32, #tpu.memory_space<vmem>>, vector<1x8x128xf32>
    %97 = vector.shape_cast %96 : vector<1x8x128xf32> to vector<8x128xf32>
    %98 = vector.shape_cast %95 : vector<8x128xf32> to vector<1x8x128xf32>
    tpu.vector_store %arg15[%c0_44, %c0_45, %c0_46], %98 {strides = array<i32>} : memref<1x8x128xf32, #tpu.memory_space<vmem>>, vector<1x8x128xf32>,
    return
  }
  func.func @transform_0(%arg0: i32, %arg1: i32) -> (i32, i32, i32) {
    %c0_i32 = arith.constant 0 : i32
    %c0_i32_0 = arith.constant 0 : i32
    %c0_i32_1 = arith.constant 0 : i32
    return %arg0, %c0_i32, %c0_i32_0 : i32, i32, i32
  }
  func.func @transform_1(%arg0: i32, %arg1: i32) -> (i32, i32) {
    %c0_i32 = arith.constant 0 : i32
    %c0_i32_0 = arith.constant 0 : i32
    %c0_i32_1 = arith.constant 0 : i32
    return %c0_i32, %c0_i32_0 : i32, i32
  }
  func.func @transform_2(%arg0: i32, %arg1: i32) -> (i32, i32) {
    %c0_i32 = arith.constant 0 : i32
    %c0_i32_0 = arith.constant 0 : i32
    %c0_i32_1 = arith.constant 0 : i32
    return %c0_i32, %c0_i32_0 : i32, i32
  }
  func.func @transform_3(%arg0: i32, %arg1: i32) -> (i32, i32) {
    %c0_i32 = arith.constant 0 : i32
    %c0_i32_0 = arith.constant 0 : i32
    %c0_i32_1 = arith.constant 0 : i32
    return %c0_i32, %c0_i32_0 : i32, i32
  }
  func.func @transform_4(%arg0: i32, %arg1: i32) -> (i32, i32) {
    %c0_i32 = arith.constant 0 : i32
    %c0_i32_0 = arith.constant 0 : i32
    %c0_i32_1 = arith.constant 0 : i32
    return %c0_i32, %c0_i32_0 : i32, i32
  }
  func.func @transform_5(%arg0: i32, %arg1: i32) -> (i32, i32) {
    %c0_i32 = arith.constant 0 : i32
    %c0_i32_0 = arith.constant 0 : i32
    %c0_i32_1 = arith.constant 0 : i32
    return %c0_i32, %c0_i32_0 : i32, i32
  }
  func.func @transform_6(%arg0: i32, %arg1: i32) -> (i32, i32) {
    %c0_i32 = arith.constant 0 : i32
    %c0_i32_0 = arith.constant 0 : i32
    %c0_i32_1 = arith.constant 0 : i32
    return %c0_i32, %c0_i32_0 : i32, i32
  }
  func.func @transform_7(%arg0: i32, %arg1: i32) -> (i32, i32) {
    %c0_i32 = arith.constant 0 : i32
    %c0_i32_0 = arith.constant 0 : i32
    %c0_i32_1 = arith.constant 0 : i32
    return %c0_i32, %c0_i32_0 : i32, i32
  }
  func.func @transform_8(%arg0: i32, %arg1: i32) -> (i32, i32) {
    %c0_i32 = arith.constant 0 : i32
    %c0_i32_0 = arith.constant 0 : i32
    %c0_i32_1 = arith.constant 0 : i32
    return %c0_i32, %c0_i32_0 : i32, i32
  }
  func.func @transform_9(%arg0: i32, %arg1: i32) -> (i32, i32) {
    %c0_i32 = arith.constant 0 : i32
    %c0_i32_0 = arith.constant 0 : i32
    %c0_i32_1 = arith.constant 0 : i32
    return %c0_i32, %c0_i32_0 : i32, i32
  }
  func.func @transform_10(%arg0: i32, %arg1: i32) -> (i32, i32) {
    %c0_i32 = arith.constant 0 : i32
    %c0_i32_0 = arith.constant 0 : i32
    %c0_i32_1 = arith.constant 0 : i32
    return %c0_i32, %c0_i32_0 : i32, i32
  }
  func.func @transform_11(%arg0: i32, %arg1: i32) -> (i32, i32) {
    %c0_i32 = arith.constant 0 : i32
    %c0_i32_0 = arith.constant 0 : i32
    %c0_i32_1 = arith.constant 0 : i32
    return %c0_i32, %c0_i32_0 : i32, i32
  }
  func.func @transform_12(%arg0: i32, %arg1: i32) -> (i32, i32) {
    %c0_i32 = arith.constant 0 : i32
    %c0_i32_0 = arith.constant 0 : i32
    %c0_i32_1 = arith.constant 0 : i32
    return %c0_i32, %c0_i32_0 : i32, i32
  }
  func.func @transform_13(%arg0: i32, %arg1: i32) -> (i32, i32, i32) {
    %c0_i32 = arith.constant 0 : i32
    %c0_i32_0 = arith.constant 0 : i32
    return %arg0, %arg1, %c0_i32 : i32, i32, i32
  }
}

</mosaic_0001>

<llo_original>
// kernel: tpu_custom_call.1
$region0: #{tpu_custom_call.1}
  #allocation0 [shape = 'u32[]', space=smem, size = 0x4, offset = 0x4, fixed_abs, tag = 'smem constant byte address 0x4 - core index']
  #allocation1 [shape = 'u32[144,128]{1,0:T(1,128)}', space=vmem, size = 0x12000, scoped, tag = 'internal scratch']
  #allocation2 [shape = 'bf16[8,128]{1,0:T(8,128)(2,1)}', space=vmem, size = 0x800, scoped, tag = 'scratch operand']
  #allocation3 [shape = 'bf16[8,128]{1,0:T(8,128)(2,1)}', space=vmem, size = 0x800, scoped, tag = 'scratch operand']
  #allocation4 [shape = 'bf16[8,128]{1,0:T(8,128)(2,1)}', space=vmem, size = 0x800, scoped, tag = 'scratch operand']
  %s0 = inlined_call_operand.hbm [shape: bf16[2,8,128], index: 0, kind: input, shape index: {}]
  %s1 = inlined_call_operand.hbm [shape: bf16[128,384], index: 1, kind: input, shape index: {}]
  %s2 = inlined_call_operand.vmem [shape: f32[1,384], index: 2, kind: input, shape index: {}]
  %s3 = inlined_call_operand.hbm [shape: bf16[128,128], index: 3, kind: input, shape index: {}]
  %s4 = inlined_call_operand.vmem [shape: f32[1,128], index: 4, kind: input, shape index: {}]
  %s5 = inlined_call_operand.vmem [shape: f32[1,128], index: 5, kind: input, shape index: {}]
  %s6 = inlined_call_operand.vmem [shape: f32[1,128], index: 6, kind: input, shape index: {}]
  %s7 = inlined_call_operand.hbm [shape: bf16[128,128], index: 7, kind: input, shape index: {}]
  %s8 = inlined_call_operand.vmem [shape: f32[1,128], index: 8, kind: input, shape index: {}]
  %s9 = inlined_call_operand.hbm [shape: bf16[128,128], index: 9, kind: input, shape index: {}]
  %s10 = inlined_call_operand.vmem [shape: f32[1,128], index: 10, kind: input, shape index: {}]
  %s11 = inlined_call_operand.vmem [shape: f32[1,128], index: 11, kind: input, shape index: {}]
  %s12 = inlined_call_operand.vmem [shape: f32[1,128], index: 12, kind: input, shape index: {}]
  %s13 = inlined_call_operand.hbm [shape: f32[2,8,128], index: 13, kind: output, shape index: {}]
  %s14 = sld [smem:[#allocation0]]
  $region109: #{tpu_custom_call.1} parent=0
    _
  %s16 = ssub.s32 1, %s14
  %s17 = scalar_select 0, %s16, %s14
  $region1: #{tpu_custom_call.1} parent=0
    #allocation5 [shape = 'u8[4096]{0}', space=vmem, size = 0x1000, scoped, tag = 'input window, operand 0']
    #allocation6 [shape = 's32[2]{0}', space=sflag, size = 0x8, scoped, tag = 'scoped memory for tpu_custom_call.1']
    #allocation7 [shape = 's32[2]{0}', space=sflag, size = 0x8, scoped, tag = 'scoped memory for tpu_custom_call.1']
    #allocation8 [shape = 'u8[98304]{0}', space=vmem, size = 0x18000, scoped, tag = 'input window, operand 1, single buffered']
    #allocation9 [shape = 's32[1]{0}', space=sflag, size = 0x4, scoped, tag = 'scoped memory for tpu_custom_call.1']
    #allocation10 [shape = 'u8[32768]{0}', space=vmem, size = 0x8000, scoped, tag = 'input window, operand 3, single buffered']
    #allocation11 [shape = 'u8[32768]{0}', space=vmem, size = 0x8000, scoped, tag = 'input window, operand 7, single buffered']
    #allocation12 [shape = 's32[1]{0}', space=sflag, size = 0x4, scoped, tag = 'scoped memory for tpu_custom_call.1']
    #allocation13 [shape = 'u8[32768]{0}', space=vmem, size = 0x8000, scoped, tag = 'input window, operand 9, single buffered']
    #allocation14 [shape = 'u8[8192]{0}', space=vmem, size = 0x2000, scoped, tag = 'output window, operand 0']
    %18 = vsyncpa [#allocation6], 0
    %s19 = scalar_lea.sflag [#allocation6], 1
    %20 = vsyncpa %s19, 0
    %21 = vsyncpa [#allocation9], 0
    %22 = vsyncpa [#allocation12], 0
    %23 = vsyncpa [#allocation7], 0
    %s24 = scalar_lea.sflag [#allocation7], 1
    %25 = vsyncpa %s24, 0
    loop: start=0, step=1, limit=4
    $region2: #{tpu_custom_call.1} parent=1 // loop_pre_header
      _
    $region3: #{tpu_custom_call.1} parent=1 // loop_header
      %s27 = sphi 0, %s31
      %p28 = scmp.ge.s32.totalorder %s27, 4
      %s34 = sphi 0, %s46
      %s35 = sphi 0, %s42
      %s36 = sphi 0, %s34
      %s37 = sphi 0, %s35
      %s38 = sphi 0, %s36
      %s39 = sphi 0, %s37
      %s49 = sphi 0, %s51
      %s52 = sphi 0, %s49
      %s53 = sphi 0, %s52
      %s69 = sphi 0, %s53
      %s73 = sphi 0, %s73
      %s75 = sphi 0, %s73
      %s76 = sphi 0, %s75
      %s90 = sphi 0, %s76
      %s94 = sphi 0, %s94
      %s96 = sphi 0, %s94
      %s97 = sphi 0, %s96
      %s111 = sphi 0, %s97
      %s115 = sphi 0, %s115
      %s117 = sphi 0, %s115
      %s118 = sphi 0, %s117
      %s132 = sphi 0, %s118
      %s136 = sphi 0, %s136
      %s138 = sphi 0, %s136
      %s139 = sphi 0, %s138
      %s153 = sphi 0, %s139
      %s157 = sphi 0, %s157
      %s159 = sphi 0, %s157
      %s160 = sphi 0, %s159
      %s174 = sphi 0, %s160
      %s178 = sphi 0, %s178
      %s180 = sphi 0, %s178
      %s181 = sphi 0, %s180
      %s195 = sphi 0, %s181
      %s199 = sphi 0, %s199
      %s201 = sphi 0, %s199
      %s202 = sphi 0, %s201
      %s216 = sphi 0, %s202
      %s220 = sphi 0, %s220
      %s222 = sphi 0, %s220
      %s223 = sphi 0, %s222
      %s237 = sphi 0, %s223
      %s241 = sphi 0, %s241
      %s243 = sphi 0, %s241
      %s244 = sphi 0, %s243
      %s258 = sphi 0, %s244
      %s262 = sphi 0, %s262
      %s264 = sphi 0, %s262
      %s265 = sphi 0, %s264
      %s279 = sphi 0, %s265
      %s283 = sphi 0, %s283
      %s285 = sphi 0, %s283
      %s286 = sphi 0, %s285
      %s300 = sphi 0, %s286
      %s304 = sphi 0, %s304
      %s306 = sphi 0, %s304
      %s307 = sphi 0, %s306
      %s321 = sphi 0, %s307
      %s329 = sphi 0, %s331
      %s332 = sphi 0, %s329
      %s333 = sphi 0, %s332
      %s349 = sphi 0, %s333
    $region4: #{tpu_custom_call.1} parent=1 // loop_header_branch
      %30 = sbr.rel (%p28) target = $region8
    $region5: #{tpu_custom_call.1} parent=1 // loop_body
      %s32 = ssub.s32 %s27, 1
      %s33 = ssub.s32 %s27, 2
      %s40 = sadd.s32 1, %s35
      %p41 = scmp.ge.s32.totalorder %s40, 1
      %s42 = scalar_select %p41, 0, %s40
      %s43 = sadd.s32 1, %s34
      %s44 = scalar_select %p41, %s43, %s34
      %p45 = scmp.ge.s32.totalorder %s44, 2
      %s46 = scalar_select %p45, 0, %s44
      %s47 = ssub.s32 %s34, %s46
      %p48 = scmp.eq.s32.totalorder %s47, 0
      %s50 = sadd.s32 %s49, 1
      %s51 = scalar_select %p48, %s49, %s50
      %p54 = pneg %p48
      %p55 = scmp.eq.s32.totalorder %s27, 1
      %p56 = por %p54, %p55
      %p57 = scmp.ne.s32.totalorder %s49, %s52
      %p58 = scmp.eq.s32.totalorder %s27, 0
      %p59 = por %p57, %p58
      %p60 = scmp.ne.s32.totalorder %s49, %s52
      %p61 = scmp.eq.s32.totalorder %s32, 1
      %p62 = por %p60, %p61
      %p63 = scmp.ne.s32.totalorder %s52, %s53
      %p64 = scmp.eq.s32.totalorder %s32, 0
      %p65 = por %p63, %p64
      %p66 = scmp.ne.s32.totalorder %s52, %s53
      %p67 = scmp.eq.s32.totalorder %s33, 1
      %p68 = por %p66, %p67
      %p70 = scmp.ne.s32.totalorder %s53, %s69
      %p71 = scmp.eq.s32.totalorder %s33, 0
      %p72 = por %p70, %p71
      %s74 = sadd.s32 %s73, 1
      %p77 = scmp.eq.s32.totalorder %s27, 1
      %p78 = scmp.ne.s32.totalorder %s73, %s75
      %p79 = scmp.eq.s32.totalorder %s27, 0
      %p80 = por %p78, %p79
      %p81 = scmp.ne.s32.totalorder %s73, %s75
      %p82 = scmp.eq.s32.totalorder %s32, 1
      %p83 = por %p81, %p82
      %p84 = scmp.ne.s32.totalorder %s75, %s76
      %p85 = scmp.eq.s32.totalorder %s32, 0
      %p86 = por %p84, %p85
      %p87 = scmp.ne.s32.totalorder %s75, %s76
      %p88 = scmp.eq.s32.totalorder %s33, 1
      %p89 = por %p87, %p88
      %p91 = scmp.ne.s32.totalorder %s76, %s90
      %p92 = scmp.eq.s32.totalorder %s33, 0
      %p93 = por %p91, %p92
      %s95 = sadd.s32 %s94, 1
      %p98 = scmp.eq.s32.totalorder %s27, 1
      %p99 = scmp.ne.s32.totalorder %s94, %s96
      %p100 = scmp.eq.s32.totalorder %s27, 0
      %p101 = por %p99, %p100
      %p102 = scmp.ne.s32.totalorder %s94, %s96
      %p103 = scmp.eq.s32.totalorder %s32, 1
      %p104 = por %p102, %p103
      %p105 = scmp.ne.s32.totalorder %s96, %s97
      %p106 = scmp.eq.s32.totalorder %s32, 0
      %p107 = por %p105, %p106
      %p108 = scmp.ne.s32.totalorder %s96, %s97
      %p109 = scmp.eq.s32.totalorder %s33, 1
      %p110 = por %p108, %p109
      %p112 = scmp.ne.s32.totalorder %s97, %s111
      %p113 = scmp.eq.s32.totalorder %s33, 0
      %p114 = por %p112, %p113
      %s116 = sadd.s32 %s115, 1
      %p119 = scmp.eq.s32.totalorder %s27, 1
      %p120 = scmp.ne.s32.totalorder %s115, %s117
      %p121 = scmp.eq.s32.totalorder %s27, 0
      %p122 = por %p120, %p121
      %p123 = scmp.ne.s32.totalorder %s115, %s117
      %p124 = scmp.eq.s32.totalorder %s32, 1
      %p125 = por %p123, %p124
      %p126 = scmp.ne.s32.totalorder %s117, %s118
      %p127 = scmp.eq.s32.totalorder %s32, 0
      %p128 = por %p126, %p127
      %p129 = scmp.ne.s32.totalorder %s117, %s118
      %p130 = scmp.eq.s32.totalorder %s33, 1
      %p131 = por %p129, %p130
      %p133 = scmp.ne.s32.totalorder %s118, %s132
      %p134 = scmp.eq.s32.totalorder %s33, 0
      %p135 = por %p133, %p134
      %s137 = sadd.s32 %s136, 1
      %p140 = scmp.eq.s32.totalorder %s27, 1
      %p141 = scmp.ne.s32.totalorder %s136, %s138
      %p142 = scmp.eq.s32.totalorder %s27, 0
      %p143 = por %p141, %p142
      %p144 = scmp.ne.s32.totalorder %s136, %s138
      %p145 = scmp.eq.s32.totalorder %s32, 1
      %p146 = por %p144, %p145
      %p147 = scmp.ne.s32.totalorder %s138, %s139
      %p148 = scmp.eq.s32.totalorder %s32, 0
      %p149 = por %p147, %p148
      %p150 = scmp.ne.s32.totalorder %s138, %s139
      %p151 = scmp.eq.s32.totalorder %s33, 1
      %p152 = por %p150, %p151
      %p154 = scmp.ne.s32.totalorder %s139, %s153
      %p155 = scmp.eq.s32.totalorder %s33, 0
      %p156 = por %p154, %p155
      %s158 = sadd.s32 %s157, 1
      %p161 = scmp.eq.s32.totalorder %s27, 1
      %p162 = scmp.ne.s32.totalorder %s157, %s159
      %p163 = scmp.eq.s32.totalorder %s27, 0
      %p164 = por %p162, %p163
      %p165 = scmp.ne.s32.totalorder %s157, %s159
      %p166 = scmp.eq.s32.totalorder %s32, 1
      %p167 = por %p165, %p166
      %p168 = scmp.ne.s32.totalorder %s159, %s160
      %p169 = scmp.eq.s32.totalorder %s32, 0
      %p170 = por %p168, %p169
      %p171 = scmp.ne.s32.totalorder %s159, %s160
      %p172 = scmp.eq.s32.totalorder %s33, 1
      %p173 = por %p171, %p172
      %p175 = scmp.ne.s32.totalorder %s160, %s174
      %p176 = scmp.eq.s32.totalorder %s33, 0
      %p177 = por %p175, %p176
      %s179 = sadd.s32 %s178, 1
      %p182 = scmp.eq.s32.totalorder %s27, 1
      %p183 = scmp.ne.s32.totalorder %s178, %s180
      %p184 = scmp.eq.s32.totalorder %s27, 0
      %p185 = por %p183, %p184
      %p186 = scmp.ne.s32.totalorder %s178, %s180
      %p187 = scmp.eq.s32.totalorder %s32, 1
      %p188 = por %p186, %p187
      %p189 = scmp.ne.s32.totalorder %s180, %s181
      %p190 = scmp.eq.s32.totalorder %s32, 0
      %p191 = por %p189, %p190
      %p192 = scmp.ne.s32.totalorder %s180, %s181
      %p193 = scmp.eq.s32.totalorder %s33, 1
      %p194 = por %p192, %p193
      %p196 = scmp.ne.s32.totalorder %s181, %s195
      %p197 = scmp.eq.s32.totalorder %s33, 0
      %p198 = por %p196, %p197
      %s200 = sadd.s32 %s199, 1
      %p203 = scmp.eq.s32.totalorder %s27, 1
      %p204 = scmp.ne.s32.totalorder %s199, %s201
      %p205 = scmp.eq.s32.totalorder %s27, 0
      %p206 = por %p204, %p205
      %p207 = scmp.ne.s32.totalorder %s199, %s201
      %p208 = scmp.eq.s32.totalorder %s32, 1
      %p209 = por %p207, %p208
      %p210 = scmp.ne.s32.totalorder %s201, %s202
      %p211 = scmp.eq.s32.totalorder %s32, 0
      %p212 = por %p210, %p211
      %p213 = scmp.ne.s32.totalorder %s201, %s202
      %p214 = scmp.eq.s32.totalorder %s33, 1
      %p215 = por %p213, %p214
      %p217 = scmp.ne.s32.totalorder %s202, %s216
      %p218 = scmp.eq.s32.totalorder %s33, 0
      %p219 = por %p217, %p218
      %s221 = sadd.s32 %s220, 1
      %p224 = scmp.eq.s32.totalorder %s27, 1
      %p225 = scmp.ne.s32.totalorder %s220, %s222
      %p226 = scmp.eq.s32.totalorder %s27, 0
      %p227 = por %p225, %p226
      %p228 = scmp.ne.s32.totalorder %s220, %s222
      %p229 = scmp.eq.s32.totalorder %s32, 1
      %p230 = por %p228, %p229
      %p231 = scmp.ne.s32.totalorder %s222, %s223
      %p232 = scmp.eq.s32.totalorder %s32, 0
      %p233 = por %p231, %p232
      %p234 = scmp.ne.s32.totalorder %s222, %s223
      %p235 = scmp.eq.s32.totalorder %s33, 1
      %p236 = por %p234, %p235
      %p238 = scmp.ne.s32.totalorder %s223, %s237
      %p239 = scmp.eq.s32.totalorder %s33, 0
      %p240 = por %p238, %p239
      %s242 = sadd.s32 %s241, 1
      %p245 = scmp.eq.s32.totalorder %s27, 1
      %p246 = scmp.ne.s32.totalorder %s241, %s243
      %p247 = scmp.eq.s32.totalorder %s27, 0
      %p248 = por %p246, %p247
      %p249 = scmp.ne.s32.totalorder %s241, %s243
      %p250 = scmp.eq.s32.totalorder %s32, 1
      %p251 = por %p249, %p250
      %p252 = scmp.ne.s32.totalorder %s243, %s244
      %p253 = scmp.eq.s32.totalorder %s32, 0
      %p254 = por %p252, %p253
      %p255 = scmp.ne.s32.totalorder %s243, %s244
      %p256 = scmp.eq.s32.totalorder %s33, 1
      %p257 = por %p255, %p256
      %p259 = scmp.ne.s32.totalorder %s244, %s258
      %p260 = scmp.eq.s32.totalorder %s33, 0
      %p261 = por %p259, %p260
      %s263 = sadd.s32 %s262, 1
      %p266 = scmp.eq.s32.totalorder %s27, 1
      %p267 = scmp.ne.s32.totalorder %s262, %s264
      %p268 = scmp.eq.s32.totalorder %s27, 0
      %p269 = por %p267, %p268
      %p270 = scmp.ne.s32.totalorder %s262, %s264
      %p271 = scmp.eq.s32.totalorder %s32, 1
      %p272 = por %p270, %p271
      %p273 = scmp.ne.s32.totalorder %s264, %s265
      %p274 = scmp.eq.s32.totalorder %s32, 0
      %p275 = por %p273, %p274
      %p276 = scmp.ne.s32.totalorder %s264, %s265
      %p277 = scmp.eq.s32.totalorder %s33, 1
      %p278 = por %p276, %p277
      %p280 = scmp.ne.s32.totalorder %s265, %s279
      %p281 = scmp.eq.s32.totalorder %s33, 0
      %p282 = por %p280, %p281
      %s284 = sadd.s32 %s283, 1
      %p287 = scmp.eq.s32.totalorder %s27, 1
      %p288 = scmp.ne.s32.totalorder %s283, %s285
      %p289 = scmp.eq.s32.totalorder %s27, 0
      %p290 = por %p288, %p289
      %p291 = scmp.ne.s32.totalorder %s283, %s285
      %p292 = scmp.eq.s32.totalorder %s32, 1
      %p293 = por %p291, %p292
      %p294 = scmp.ne.s32.totalorder %s285, %s286
      %p295 = scmp.eq.s32.totalorder %s32, 0
      %p296 = por %p294, %p295
      %p297 = scmp.ne.s32.totalorder %s285, %s286
      %p298 = scmp.eq.s32.totalorder %s33, 1
      %p299 = por %p297, %p298
      %p301 = scmp.ne.s32.totalorder %s286, %s300
      %p302 = scmp.eq.s32.totalorder %s33, 0
      %p303 = por %p301, %p302
      %s305 = sadd.s32 %s304, 1
      %p308 = scmp.eq.s32.totalorder %s27, 1
      %p309 = scmp.ne.s32.totalorder %s304, %s306
      %p310 = scmp.eq.s32.totalorder %s27, 0
      %p311 = por %p309, %p310
      %p312 = scmp.ne.s32.totalorder %s304, %s306
      %p313 = scmp.eq.s32.totalorder %s32, 1
      %p314 = por %p312, %p313
      %p315 = scmp.ne.s32.totalorder %s306, %s307
      %p316 = scmp.eq.s32.totalorder %s32, 0
      %p317 = por %p315, %p316
      %p318 = scmp.ne.s32.totalorder %s306, %s307
      %p319 = scmp.eq.s32.totalorder %s33, 1
      %p320 = por %p318, %p319
      %p322 = scmp.ne.s32.totalorder %s307, %s321
      %p323 = scmp.eq.s32.totalorder %s33, 0
      %p324 = por %p322, %p323
      %s325 = ssub.s32 %s34, %s46
      %s326 = ssub.s32 %s35, %s42
      %s327 = sor.u32 %s325, %s326
      %p328 = scmp.eq.s32.totalorder %s327, 0
      %s330 = sadd.s32 %s329, 1
      %s331 = scalar_select %p328, %s329, %s330
      %p334 = pneg %p328
      %p335 = scmp.eq.s32.totalorder %s27, 1
      %p336 = por %p334, %p335
      %p337 = scmp.ne.s32.totalorder %s329, %s332
      %p338 = scmp.eq.s32.totalorder %s27, 0
      %p339 = por %p337, %p338
      %p340 = scmp.ne.s32.totalorder %s329, %s332
      %p341 = scmp.eq.s32.totalorder %s32, 1
      %p342 = por %p340, %p341
      %p343 = scmp.ne.s32.totalorder %s332, %s333
      %p344 = scmp.eq.s32.totalorder %s32, 0
      %p345 = por %p343, %p344
      %p346 = scmp.ne.s32.totalorder %s332, %s333
      %p347 = scmp.eq.s32.totalorder %s33, 1
      %p348 = por %p346, %p347
      %p350 = scmp.ne.s32.totalorder %s333, %s349
      %p351 = scmp.eq.s32.totalorder %s33, 0
      %p352 = por %p350, %p351
      %p353 = scmp.le.s32.totalorder 1, %s27
      %p354 = scmp.lt.s32.totalorder %s27, 3
      %p355 = pnand %p353, %p354
      %p356 = pneg %p355
      // Predicated region
      $region9: #{tpu_custom_call.1} parent=5 // pred_check
        _
      $region10: #{tpu_custom_call.1} parent=5 // pred_check_branch
        %358 = sbr.rel (%p355) target = $region12
      $region11: #{tpu_custom_call.1} parent=5 // pred_region
        %s359 = ssub.s32 %s27, 1
        // Predicated region
        $region13: #{tpu_custom_call.1} parent=11 // pred_check
          %p360 = pneg %p86
        $region14: #{tpu_custom_call.1} parent=11 // pred_check_branch
          %362 = sbr.rel (%p360) target = $region16
        $region15: #{tpu_custom_call.1} parent=11 // pred_region
          %s364 = ssub.s32 3072, 3072
          %365 = vsyncadd [#allocation9], %s364
          %s366 = sshll.u32 [#allocation8], 4
          %s367 = int_to_ptr.vmem [resolvable:$true] %s366
          %372 = dma.hbm_to_vmem [thread:$0]  %s1, 3072, %s367, [#allocation9], 192, 192, 12
        $region16: #{tpu_custom_call.1} parent=11 // pred_fallthru
          _
        // Predicated region
        $region17: #{tpu_custom_call.1} parent=11 // pred_check
          %p373 = pneg %p107
        $region18: #{tpu_custom_call.1} parent=11 // pred_check_branch
          %375 = sbr.rel (%p373) target = $region20
        $region19: #{tpu_custom_call.1} parent=11 // pred_region
          _
        $region20: #{tpu_custom_call.1} parent=11 // pred_fallthru
          _
        // Predicated region
        $region21: #{tpu_custom_call.1} parent=11 // pred_check
          %p376 = pneg %p128
        $region22: #{tpu_custom_call.1} parent=11 // pred_check_branch
          %378 = sbr.rel (%p376) target = $region24
        $region23: #{tpu_custom_call.1} parent=11 // pred_region
          %s380 = ssub.s32 1024, 1024
          %381 = vsyncadd [#allocation9], %s380
          %s382 = sshll.u32 [#allocation10], 4
          %s383 = int_to_ptr.vmem [resolvable:$true] %s382
          %388 = dma.hbm_to_vmem [thread:$0]  %s3, 1024, %s383, [#allocation9], 64, 64, 4
        $region24: #{tpu_custom_call.1} parent=11 // pred_fallthru
          _
        // Predicated region
        $region25: #{tpu_custom_call.1} parent=11 // pred_check
          %p389 = pneg %p149
        $region26: #{tpu_custom_call.1} parent=11 // pred_check_branch
          %391 = sbr.rel (%p389) target = $region28
        $region27: #{tpu_custom_call.1} parent=11 // pred_region
          _
        $region28: #{tpu_custom_call.1} parent=11 // pred_fallthru
          _
        // Predicated region
        $region29: #{tpu_custom_call.1} parent=11 // pred_check
          %p392 = pneg %p170
        $region30: #{tpu_custom_call.1} parent=11 // pred_check_branch
          %394 = sbr.rel (%p392) target = $region32
        $region31: #{tpu_custom_call.1} parent=11 // pred_region
          _
        $region32: #{tpu_custom_call.1} parent=11 // pred_fallthru
          _
        // Predicated region
        $region33: #{tpu_custom_call.1} parent=11 // pred_check
          %p395 = pneg %p191
        $region34: #{tpu_custom_call.1} parent=11 // pred_check_branch
          %397 = sbr.rel (%p395) target = $region36
        $region35: #{tpu_custom_call.1} parent=11 // pred_region
          _
        $region36: #{tpu_custom_call.1} parent=11 // pred_fallthru
          _
        // Predicated region
        $region37: #{tpu_custom_call.1} parent=11 // pred_check
          %p398 = pneg %p212
        $region38: #{tpu_custom_call.1} parent=11 // pred_check_branch
          %400 = sbr.rel (%p398) target = $region40
        $region39: #{tpu_custom_call.1} parent=11 // pred_region
          %s402 = ssub.s32 1024, 1024
          %403 = vsyncadd [#allocation12], %s402
          %s404 = sshll.u32 [#allocation11], 4
          %s405 = int_to_ptr.vmem [resolvable:$true] %s404
          %410 = dma.hbm_to_vmem [thread:$0]  %s7, 1024, %s405, [#allocation12], 64, 64, 4
        $region40: #{tpu_custom_call.1} parent=11 // pred_fallthru
          _
        // Predicated region
        $region41: #{tpu_custom_call.1} parent=11 // pred_check
          %p411 = pneg %p233
        $region42: #{tpu_custom_call.1} parent=11 // pred_check_branch
          %413 = sbr.rel (%p411) target = $region44
        $region43: #{tpu_custom_call.1} parent=11 // pred_region
          _
        $region44: #{tpu_custom_call.1} parent=11 // pred_fallthru
          _
        // Predicated region
        $region45: #{tpu_custom_call.1} parent=11 // pred_check
          %p414 = pneg %p254
        $region46: #{tpu_custom_call.1} parent=11 // pred_check_branch
          %416 = sbr.rel (%p414) target = $region48
        $region47: #{tpu_custom_call.1} parent=11 // pred_region
          %s418 = ssub.s32 1024, 1024
          %419 = vsyncadd [#allocation12], %s418
          %s420 = sshll.u32 [#allocation13], 4
          %s421 = int_to_ptr.vmem [resolvable:$true] %s420
          %426 = dma.hbm_to_vmem [thread:$0]  %s9, 1024, %s421, [#allocation12], 64, 64, 4
        $region48: #{tpu_custom_call.1} parent=11 // pred_fallthru
          _
        // Predicated region
        $region49: #{tpu_custom_call.1} parent=11 // pred_check
          %p427 = pneg %p275
        $region50: #{tpu_custom_call.1} parent=11 // pred_check_branch
          %429 = sbr.rel (%p427) target = $region52
        $region51: #{tpu_custom_call.1} parent=11 // pred_region
          _
        $region52: #{tpu_custom_call.1} parent=11 // pred_fallthru
          _
        // Predicated region
        $region53: #{tpu_custom_call.1} parent=11 // pred_check
          %p430 = pneg %p296
        $region54: #{tpu_custom_call.1} parent=11 // pred_check_branch
          %432 = sbr.rel (%p430) target = $region56
        $region55: #{tpu_custom_call.1} parent=11 // pred_region
          _
        $region56: #{tpu_custom_call.1} parent=11 // pred_fallthru
          _
        // Predicated region
        $region57: #{tpu_custom_call.1} parent=11 // pred_check
          %p433 = pneg %p317
        $region58: #{tpu_custom_call.1} parent=11 // pred_check_branch
          %435 = sbr.rel (%p433) target = $region60
        $region59: #{tpu_custom_call.1} parent=11 // pred_region
          _
        $region60: #{tpu_custom_call.1} parent=11 // pred_fallthru
          _
      $region12: #{tpu_custom_call.1} parent=5 // pred_fallthru
        _
      %p436 = scmp.lt.s32.totalorder %s27, 2
      // Predicated region
      $region61: #{tpu_custom_call.1} parent=5 // pred_check
        %p437 = pneg %p436
      $region62: #{tpu_custom_call.1} parent=5 // pred_check_branch
        %439 = sbr.rel (%p437) target = $region64
      $region63: #{tpu_custom_call.1} parent=5 // pred_region
        // Predicated region
        $region65: #{tpu_custom_call.1} parent=63 // pred_check
          %p440 = pneg %p59
        $region66: #{tpu_custom_call.1} parent=63 // pred_check_branch
          %442 = sbr.rel (%p440) target = $region68
        $region67: #{tpu_custom_call.1} parent=63 // pred_region
          %s443 = sand.u32 %s49, 1
          %s444 = scalar_lea.sflag [#allocation6], %s443
          %s445 = sand.u32 %s49, 1
          %s446 = smul.addr %s445, 4
          %s447 = scalar_lea.vmem [#allocation5], %s446
          %s449 = ssub.s32 64, 64
          %450 = vsyncadd %s444, %s449
          %s451 = smul.addr %s34, 64
          %s452 = scalar_lea.hbm %s0, %s451
          %s454 = sshll.u32 %s447, 4
          %s455 = int_to_ptr.vmem [resolvable:$true] %s454
          %457 = dma.hbm_to_vmem [thread:$0]  %s452, 64, %s455, %s444
        $region68: #{tpu_custom_call.1} parent=63 // pred_fallthru
          _
      $region64: #{tpu_custom_call.1} parent=5 // pred_fallthru
        _
      %p458 = scmp.le.s32.totalorder 1, %s27
      %p459 = scmp.lt.s32.totalorder %s27, 3
      %p460 = pnand %p458, %p459
      %p461 = pneg %p460
      // Predicated region
      $region69: #{tpu_custom_call.1} parent=5 // pred_check
        _
      $region70: #{tpu_custom_call.1} parent=5 // pred_check_branch
        %463 = sbr.rel (%p460) target = $region72
      $region71: #{tpu_custom_call.1} parent=5 // pred_region
        %s464 = ssub.s32 %s27, 1
        %s465 = sand.u32 %s52, 1
        %s466 = scalar_lea.sflag [#allocation6], %s465
        %s467 = sand.u32 %s52, 1
        %s468 = smul.addr %s467, 4
        %s469 = scalar_lea.vmem [#allocation5], %s468
        // Predicated region
        $region73: #{tpu_custom_call.1} parent=71 // pred_check
          %p470 = pneg %p65
        $region74: #{tpu_custom_call.1} parent=71 // pred_check_branch
          %472 = sbr.rel (%p470) target = $region76
        $region75: #{tpu_custom_call.1} parent=71 // pred_region
          %473 = dma.done %s466, 64
        $region76: #{tpu_custom_call.1} parent=71 // pred_fallthru
          _
        // Predicated region
        $region77: #{tpu_custom_call.1} parent=71 // pred_check
          %p474 = pneg %p86
        $region78: #{tpu_custom_call.1} parent=71 // pred_check_branch
          %476 = sbr.rel (%p474) target = $region80
        $region79: #{tpu_custom_call.1} parent=71 // pred_region
          %477 = dma.done [#allocation9], 3072
        $region80: #{tpu_custom_call.1} parent=71 // pred_fallthru
          _
        // Predicated region
        $region81: #{tpu_custom_call.1} parent=71 // pred_check
          %p478 = pneg %p128
        $region82: #{tpu_custom_call.1} parent=71 // pred_check_branch
          %480 = sbr.rel (%p478) target = $region84
        $region83: #{tpu_custom_call.1} parent=71 // pred_region
          %481 = dma.done [#allocation9], 1024
        $region84: #{tpu_custom_call.1} parent=71 // pred_fallthru
          _
        // Predicated region
        $region85: #{tpu_custom_call.1} parent=71 // pred_check
          %p482 = pneg %p212
        $region86: #{tpu_custom_call.1} parent=71 // pred_check_branch
          %484 = sbr.rel (%p482) target = $region88
        $region87: #{tpu_custom_call.1} parent=71 // pred_region
          %485 = dma.done [#allocation12], 1024
        $region88: #{tpu_custom_call.1} parent=71 // pred_fallthru
          _
        // Predicated region
        $region89: #{tpu_custom_call.1} parent=71 // pred_check
          %p486 = pneg %p254
        $region90: #{tpu_custom_call.1} parent=71 // pred_check_branch
          %488 = sbr.rel (%p486) target = $region92
        $region91: #{tpu_custom_call.1} parent=71 // pred_region
          %489 = dma.done [#allocation12], 1024
        $region92: #{tpu_custom_call.1} parent=71 // pred_fallthru
          _
        %s490 = sand.u32 %s52, 1
        %s491 = scalar_lea.sflag [#allocation6], %s490
        %s492 = sand.u32 %s52, 1
        %s493 = smul.addr %s492, 4
        %s494 = scalar_lea.vmem [#allocation5], %s493
        %p495 = pneg %p65
        %p496 = pneg %p62
        %p497 = pneg %p86
        %p498 = pneg %p83
        %p499 = pneg %p107
        %p500 = pneg %p104
        %p501 = pneg %p128
        %p502 = pneg %p125
        %p503 = pneg %p149
        %p504 = pneg %p146
        %p505 = pneg %p170
        %p506 = pneg %p167
        %p507 = pneg %p191
        %p508 = pneg %p188
        %p509 = pneg %p212
        %p510 = pneg %p209
        %p511 = pneg %p233
        %p512 = pneg %p230
        %p513 = pneg %p254
        %p514 = pneg %p251
        %p515 = pneg %p275
        %p516 = pneg %p272
        %p517 = pneg %p296
        %p518 = pneg %p293
        %p519 = pneg %p317
        %p520 = pneg %p314
        %p521 = pneg %p345
        %p522 = pneg %p342
        %s523 = sand.u32 %s332, 1
        %s524 = scalar_lea.sflag [#allocation7], %s523
        %s525 = sand.u32 %s332, 1
        %s526 = smul.addr %s525, 8
        %s527 = scalar_lea.vmem [#allocation14], %s526
        %p529 = scmp.eq.s32.totalorder %s37, 0
        // Predicated region
        $region93: #{tpu_custom_call.1} parent=71 // pred_check
          %p530 = pneg %p529
        $region94: #{tpu_custom_call.1} parent=71 // pred_check_branch
          %532 = sbr.rel (%p530) target = $region96
        $region95: #{tpu_custom_call.1} parent=71 // pred_region
          %v533 = vld [vmem:[%s469] sm:$0xf]
          %v534 = vld [vmem:[#allocation8] sm:$0xff]
          %v535 = vld [vmem:[#allocation8 + $0x8] sm:$0xf]
          %v536 = vld [vmem:[#allocation8 + $0xc] sm:$0xff]
          %v537 = vld [vmem:[#allocation8 + $0x14] sm:$0xf]
          %v538 = vld [vmem:[#allocation8 + $0x18] sm:$0xff]
          %v539 = vld [vmem:[#allocation8 + $0x20] sm:$0xf]
          %v540 = vld [vmem:[#allocation8 + $0x24] sm:$0xff]
          %v541 = vld [vmem:[#allocation8 + $0x2c] sm:$0xf]
          %v542 = vld [vmem:[#allocation8 + $0x30] sm:$0xff]
          %v543 = vld [vmem:[#allocation8 + $0x38] sm:$0xf]
          %v544 = vld [vmem:[#allocation8 + $0x3c] sm:$0xff]
          %v545 = vld [vmem:[#allocation8 + $0x44] sm:$0xf]
          %v546 = vld [vmem:[#allocation8 + $0x48] sm:$0xff]
          %v547 = vld [vmem:[#allocation8 + $0x50] sm:$0xf]
          %v548 = vld [vmem:[#allocation8 + $0x54] sm:$0xff]
          %v549 = vld [vmem:[#allocation8 + $0x5c] sm:$0xf]
          %v550 = vld [vmem:[#allocation8 + $0x60] sm:$0xff]
          %v551 = vld [vmem:[#allocation8 + $0x68] sm:$0xf]
          %v552 = vld [vmem:[#allocation8 + $0x6c] sm:$0xff]
          %v553 = vld [vmem:[#allocation8 + $0x74] sm:$0xf]
          %v554 = vld [vmem:[#allocation8 + $0x78] sm:$0xff]
          %v555 = vld [vmem:[#allocation8 + $0x80] sm:$0xf]
          %v556 = vld [vmem:[#allocation8 + $0x84] sm:$0xff]
          %v557 = vld [vmem:[#allocation8 + $0x8c] sm:$0xf]
          %v558 = vld [vmem:[#allocation8 + $0x90] sm:$0xff]
          %v559 = vld [vmem:[#allocation8 + $0x98] sm:$0xf]
          %v560 = vld [vmem:[#allocation8 + $0x9c] sm:$0xff]
          %v561 = vld [vmem:[#allocation8 + $0xa4] sm:$0xf]
          %v562 = vld [vmem:[#allocation8 + $0xa8] sm:$0xff]
          %v563 = vld [vmem:[#allocation8 + $0xb0] sm:$0xf]
          %v564 = vld [vmem:[#allocation8 + $0xb4] sm:$0xff]
          %v565 = vld [vmem:[#allocation8 + $0xbc] sm:$0xf]
          %v566 = vld [vmem:[%s2] sm:$0x7]
          %v568 = vlaneseq
          %v569 = vshrl.u32 %v568, 7
          %v570 = vsub.s32 0, %v569
          %v571 = vrot.slane %v566, %v570
          %v572 = vlaneseq
          %v573 = vshrl.u32 %v572, 7
          %v574 = vsub.s32 1, %v573
          %v575 = vrot.slane %v566, %v574
          %v576 = vlaneseq
          %v577 = vshrl.u32 %v576, 7
          %v578 = vsub.s32 2, %v577
          %v579 = vrot.slane %v566, %v578
          %v615 = vunpack.c.l.b16 %v534
          %v616 = vunpack.c.h.b16 %v534
          %v617 = vunpack.c.l.b16 %v535
          %v618 = vunpack.c.l.b16 %v536
          %v619 = vunpack.c.h.b16 %v536
          %v620 = vunpack.c.l.b16 %v537
          %v621 = vunpack.c.l.b16 %v538
          %v622 = vunpack.c.h.b16 %v538
          %v623 = vunpack.c.l.b16 %v539
          %v624 = vunpack.c.l.b16 %v540
          %v625 = vunpack.c.h.b16 %v540
          %v626 = vunpack.c.l.b16 %v541
          %v627 = vunpack.c.l.b16 %v542
          %v628 = vunpack.c.h.b16 %v542
          %v629 = vunpack.c.l.b16 %v543
          %v630 = vunpack.c.l.b16 %v544
          %v631 = vunpack.c.h.b16 %v544
          %v632 = vunpack.c.l.b16 %v545
          %v633 = vunpack.c.l.b16 %v546
          %v634 = vunpack.c.h.b16 %v546
          %v635 = vunpack.c.l.b16 %v547
          %v636 = vunpack.c.l.b16 %v548
          %v637 = vunpack.c.h.b16 %v548
          %v638 = vunpack.c.l.b16 %v549
          %v639 = vunpack.c.l.b16 %v550
          %v640 = vunpack.c.h.b16 %v550
          %v641 = vunpack.c.l.b16 %v551
          %v642 = vunpack.c.l.b16 %v552
          %v643 = vunpack.c.h.b16 %v552
          %v644 = vunpack.c.l.b16 %v553
          %v645 = vunpack.c.l.b16 %v554
          %v646 = vunpack.c.h.b16 %v554
          %v647 = vunpack.c.l.b16 %v555
          %v648 = vunpack.c.l.b16 %v556
          %v649 = vunpack.c.h.b16 %v556
          %v650 = vunpack.c.l.b16 %v557
          %v651 = vunpack.c.l.b16 %v558
          %v652 = vunpack.c.h.b16 %v558
          %v653 = vunpack.c.l.b16 %v559
          %v654 = vunpack.c.l.b16 %v560
          %v655 = vunpack.c.h.b16 %v560
          %v656 = vunpack.c.l.b16 %v561
          %v657 = vunpack.c.l.b16 %v562
          %v658 = vunpack.c.h.b16 %v562
          %v659 = vunpack.c.l.b16 %v563
          %v660 = vunpack.c.l.b16 %v564
          %v661 = vunpack.c.h.b16 %v564
          %v662 = vunpack.c.l.b16 %v565
          %v663 = vpack.c.b16 %v618, %v615
          %v664 = vpack.c.b16 %v619, %v616
          %v665 = vpack.c.b16 %v620, %v617
          %v666 = vpack.c.b16 %v624, %v621
          %v667 = vpack.c.b16 %v625, %v622
          %v668 = vpack.c.b16 %v626, %v623
          %v669 = vpack.c.b16 %v630, %v627
          %v670 = vpack.c.b16 %v631, %v628
          %v671 = vpack.c.b16 %v632, %v629
          %v672 = vpack.c.b16 %v636, %v633
          %v673 = vpack.c.b16 %v637, %v634
          %v674 = vpack.c.b16 %v638, %v635
          %v675 = vpack.c.b16 %v642, %v639
          %v676 = vpack.c.b16 %v643, %v640
          %v677 = vpack.c.b16 %v644, %v641
          %v678 = vpack.c.b16 %v648, %v645
          %v679 = vpack.c.b16 %v649, %v646
          %v680 = vpack.c.b16 %v650, %v647
          %v681 = vpack.c.b16 %v654, %v651
          %v682 = vpack.c.b16 %v655, %v652
          %v683 = vpack.c.b16 %v656, %v653
          %v684 = vpack.c.b16 %v660, %v657
          %v685 = vpack.c.b16 %v661, %v658
          %v686 = vpack.c.b16 %v662, %v659
          %711 = vmatprep.subr.bf16.mxu0 %v685
          %712 = vmatpush1.bf16.msra.mxu0 %v684
          %713 = vmatprep.subr.bf16.mxu0 %v682
          %714 = vmatpush1.bf16.msra.mxu0 %v681
          %715 = vmatprep.subr.bf16.mxu0 %v679
          %716 = vmatpush1.bf16.msra.mxu0 %v678
          %717 = vmatprep.subr.bf16.mxu0 %v676
          %718 = vmatpush1.bf16.msra.mxu0 %v675
          %719 = vmatprep.subr.bf16.mxu0 %v673
          %720 = vmatpush1.bf16.msra.mxu0 %v672
          %721 = vmatprep.subr.bf16.mxu0 %v670
          %722 = vmatpush1.bf16.msra.mxu0 %v669
          %723 = vmatprep.subr.bf16.mxu0 %v667
          %724 = vmatpush1.bf16.msra.mxu0 %v666
          %725 = vmatprep.subr.bf16.mxu0 %v664
          %726 = vmatpush1.bf16.msra.mxu0 %v663
          %727 = vmatprep.subr.bf16.mxu0 0
          %728 = vmatpush2.bf16.msra.mxu0 0
          %729 = vmatprep.subr.bf16.mxu0 0
          %730 = vmatpush2.bf16.msra.mxu0 0
          %731 = vmatprep.subr.bf16.mxu0 0
          %732 = vmatpush2.bf16.msra.mxu0 0
          %733 = vmatprep.subr.bf16.mxu0 0
          %734 = vmatpush2.bf16.msra.mxu0 0
          %735 = vmatprep.subr.bf16.mxu0 0
          %736 = vmatpush2.bf16.msra.mxu0 0
          %737 = vmatprep.subr.bf16.mxu0 0
          %738 = vmatpush2.bf16.msra.mxu0 0
          %739 = vmatprep.subr.bf16.mxu0 0
          %740 = vmatpush2.bf16.msra.mxu0 0
          %741 = vmatprep.subr.bf16.mxu0 0
          %742 = vmatpush2.bf16.msra.mxu0 0
          %743 = vmatprep.mubr.bf16.mxu0 0
          %744 = vmatmul.mubr.bf16.gmra.mxu0 %v533
          %v745 = vpop.f32.mrf.mxu0
          %v746 = vadd.f32 %v571, %v745
          %v747 = vpop.f32.mrf.mxu0
          %v748 = vadd.f32 %v575, %v747
          %v749 = vpop.f32.mrf.mxu0
          %v750 = vpop.f32.mrf.mxu0
          %751 = vdwg.mxu0
          %752 = vmatprep.subr.bf16.mxu0 0
          %753 = vmatpush1.bf16.msra.mxu0 %v686
          %754 = vmatprep.subr.bf16.mxu0 0
          %755 = vmatpush1.bf16.msra.mxu0 %v683
          %756 = vmatprep.subr.bf16.mxu0 0
          %757 = vmatpush1.bf16.msra.mxu0 %v680
          %758 = vmatprep.subr.bf16.mxu0 0
          %759 = vmatpush1.bf16.msra.mxu0 %v677
          %760 = vmatprep.subr.bf16.mxu0 0
          %761 = vmatpush1.bf16.msra.mxu0 %v674
          %762 = vmatprep.subr.bf16.mxu0 0
          %763 = vmatpush1.bf16.msra.mxu0 %v671
          %764 = vmatprep.subr.bf16.mxu0 0
          %765 = vmatpush1.bf16.msra.mxu0 %v668
          %766 = vmatprep.subr.bf16.mxu0 0
          %767 = vmatpush1.bf16.msra.mxu0 %v665
          %768 = vmatprep.subr.bf16.mxu0 0
          %769 = vmatpush2.bf16.msra.mxu0 0
          %770 = vmatprep.subr.bf16.mxu0 0
          %771 = vmatpush2.bf16.msra.mxu0 0
          %772 = vmatprep.subr.bf16.mxu0 0
          %773 = vmatpush2.bf16.msra.mxu0 0
          %774 = vmatprep.subr.bf16.mxu0 0
          %775 = vmatpush2.bf16.msra.mxu0 0
          %776 = vmatprep.subr.bf16.mxu0 0
          %777 = vmatpush2.bf16.msra.mxu0 0
          %778 = vmatprep.subr.bf16.mxu0 0
          %779 = vmatpush2.bf16.msra.mxu0 0
          %780 = vmatprep.subr.bf16.mxu0 0
          %781 = vmatpush2.bf16.msra.mxu0 0
          %782 = vmatprep.subr.bf16.mxu0 0
          %783 = vmatpush2.bf16.msra.mxu0 0
          %784 = vmatprep.mubr.bf16.mxu0 0
          %785 = vmatmul.mubr.bf16.gmra.mxu0 %v533
          %v786 = vpop.f32.mrf.mxu0
          %v787 = vadd.f32 %v579, %v786
          %v788 = vpop.f32.mrf.mxu0
          %v789 = vpop.f32.mrf.mxu0
          %v790 = vpop.f32.mrf.mxu0
          %791 = vdwg.mxu0
          %v792 = vmul.f32 %v746, 0.25
          %v793 = vpack.c.bf16 %v792, %v792
          %794 = vst [vmem:[#allocation2] sm:$0xf] %v793
          %v795 = vpack.c.bf16 %v748, %v748
          %796 = vst [vmem:[#allocation3] sm:$0xf] %v795
          %v797 = vpack.c.bf16 %v787, %v787
          %798 = vst [vmem:[#allocation4] sm:$0xf] %v797
        $region96: #{tpu_custom_call.1} parent=71 // pred_fallthru
          _
        %s799 = smul.u32 %s37, 8
        %s800 = sshra.s32 %s799, 3
        %s801 = sand.u32 %s799, 7
        %s802 = smul.addr %s800, 4
        %s803 = scalar_lea.vmem %s469, %s802 [#allocation5]
        %v804 = vld [vmem:[%s803] sm:$0xf]
        %s805 = smul.addr %s800, 4
        %s806 = scalar_lea.vmem [#allocation2], %s805
        %v807 = vld [vmem:[%s806] sm:$0xf]
        %v808 = vld [vmem:[#allocation3] sm:$0xf]
        %809 = vmatprep.subr.bf16.mxu0 0
        %810 = vmatpush1.bf16.xpose.msra.mxu0 0
        %811 = vmatprep.subr.bf16.mxu0 0
        %812 = vmatpush1.bf16.xpose.msra.mxu0 0
        %813 = vmatprep.subr.bf16.mxu0 0
        %814 = vmatpush1.bf16.xpose.msra.mxu0 0
        %815 = vmatprep.subr.bf16.mxu0 0
        %816 = vmatpush1.bf16.xpose.msra.mxu0 0
        %817 = vmatprep.subr.bf16.mxu0 0
        %818 = vmatpush1.bf16.xpose.msra.mxu0 0
        %819 = vmatprep.subr.bf16.mxu0 0
        %820 = vmatpush1.bf16.xpose.msra.mxu0 0
        %821 = vmatprep.subr.bf16.mxu0 0
        %822 = vmatpush1.bf16.xpose.msra.mxu0 0
        %823 = vmatprep.subr.bf16.mxu0 0
        %824 = vmatpush1.bf16.xpose.msra.mxu0 %v808
        %825 = vmatprep.subr.bf16.mxu0 0
        %826 = vmatpush2.bf16.xpose.msra.mxu0 0
        %827 = vmatprep.subr.bf16.mxu0 0
        %828 = vmatpush2.bf16.xpose.msra.mxu0 0
        %829 = vmatprep.subr.bf16.mxu0 0
        %830 = vmatpush2.bf16.xpose.msra.mxu0 0
        %831 = vmatprep.subr.bf16.mxu0 0
        %832 = vmatpush2.bf16.xpose.msra.mxu0 0
        %833 = vmatprep.subr.bf16.mxu0 0
        %834 = vmatpush2.bf16.xpose.msra.mxu0 0
        %835 = vmatprep.subr.bf16.mxu0 0
        %836 = vmatpush2.bf16.xpose.msra.mxu0 0
        %837 = vmatprep.subr.bf16.mxu0 0
        %838 = vmatpush2.bf16.xpose.msra.mxu0 0
        %839 = vmatprep.subr.bf16.mxu0 0
        %840 = vmatpush2.bf16.xpose.msra.mxu0 0
        %841 = vmatprep.mubr.bf16.mxu0 0
        %842 = vmatmul.mubr.bf16.gmra.mxu0 %v807
        %v843 = vpop.f32.mrf.mxu0
        %v844 = vadd.f32 0.0, %v843
        %v845 = vpop.f32.mrf.mxu0
        %v846 = vpop.f32.mrf.mxu0
        %v847 = vpop.f32.mrf.mxu0
        %848 = vdwg.mxu0
        %vm849 = vcmask 64512
        %v850 = vsel %vm849, %v844, -inf
        %851 = vmax.xlane.f32.xlu0 %v850
        %v852 = vpop.xlane.xlu0 %851
        %v853 = vsub.f32 %v844, %v852
        %v854 = vmul.f32 %v853, 1.442695
        %v855 = vpow.pop %v854
        %v856 = vsel %vm849, %v855, 0.0
        %857 = vadd.xlane.f32.xlu0 %v856
        %v858 = vpop.xlane.xlu0 %857
        %v859 = vpack.c.bf16 %v855, %v855
        %v860 = vld [vmem:[#allocation4] sm:$0xf]
        %v862 = vsel %vm849, %v859, 0
        %vm864 = vcmask 1043456
        %v866 = vsel %vm864, %v860, 0
        %868 = vmatprep.subr.bf16.mxu0 0
        %869 = vmatpush1.bf16.msra.mxu0 0
        %870 = vmatprep.subr.bf16.mxu0 0
        %871 = vmatpush1.bf16.msra.mxu0 0
        %872 = vmatprep.subr.bf16.mxu0 0
        %873 = vmatpush1.bf16.msra.mxu0 0
        %874 = vmatprep.subr.bf16.mxu0 0
        %875 = vmatpush1.bf16.msra.mxu0 0
        %876 = vmatprep.subr.bf16.mxu0 0
        %877 = vmatpush1.bf16.msra.mxu0 0
        %878 = vmatprep.subr.bf16.mxu0 0
        %879 = vmatpush1.bf16.msra.mxu0 0
        %880 = vmatprep.subr.bf16.mxu0 0
        %881 = vmatpush1.bf16.msra.mxu0 0
        %882 = vmatprep.subr.bf16.mxu0 0
        %883 = vmatpush1.bf16.msra.mxu0 %v866
        %884 = vmatprep.subr.bf16.mxu0 0
        %885 = vmatpush2.bf16.msra.mxu0 0
        %886 = vmatprep.subr.bf16.mxu0 0
        %887 = vmatpush2.bf16.msra.mxu0 0
        %888 = vmatprep.subr.bf16.mxu0 0
        %889 = vmatpush2.bf16.msra.mxu0 0
        %890 = vmatprep.subr.bf16.mxu0 0
        %891 = vmatpush2.bf16.msra.mxu0 0
        %892 = vmatprep.subr.bf16.mxu0 0
        %893 = vmatpush2.bf16.msra.mxu0 0
        %894 = vmatprep.subr.bf16.mxu0 0
        %895 = vmatpush2.bf16.msra.mxu0 0
        %896 = vmatprep.subr.bf16.mxu0 0
        %897 = vmatpush2.bf16.msra.mxu0 0
        %898 = vmatprep.subr.bf16.mxu0 0
        %899 = vmatpush2.bf16.msra.mxu0 0
        %900 = vmatprep.mubr.bf16.mxu0 0
        %901 = vmatmul.mubr.bf16.gmra.mxu0 %v862
        %v902 = vpop.f32.mrf.mxu0
        %v903 = vadd.f32 0.0, %v902
        %v904 = vpop.f32.mrf.mxu0
        %v905 = vpop.f32.mrf.mxu0
        %v906 = vpop.f32.mrf.mxu0
        %907 = vdwg.mxu0
        %v908 = vrcp.pop %v858
        %v909 = vmul.f32 %v903, %v908
        %v910 = vpack.c.bf16 %v909, %v909
        %v911 = vld [vmem:[#allocation10] sm:$0xf]
        %v912 = vld [vmem:[#allocation10 + $0x4] sm:$0xf]
        %v913 = vld [vmem:[#allocation10 + $0x8] sm:$0xf]
        %v914 = vld [vmem:[#allocation10 + $0xc] sm:$0xf]
        %v915 = vld [vmem:[#allocation10 + $0x10] sm:$0xf]
        %v916 = vld [vmem:[#allocation10 + $0x14] sm:$0xf]
        %v917 = vld [vmem:[#allocation10 + $0x18] sm:$0xf]
        %v918 = vld [vmem:[#allocation10 + $0x1c] sm:$0xf]
        %v919 = vld [vmem:[#allocation10 + $0x20] sm:$0xf]
        %v920 = vld [vmem:[#allocation10 + $0x24] sm:$0xf]
        %v921 = vld [vmem:[#allocation10 + $0x28] sm:$0xf]
        %v922 = vld [vmem:[#allocation10 + $0x2c] sm:$0xf]
        %v923 = vld [vmem:[#allocation10 + $0x30] sm:$0xf]
        %v924 = vld [vmem:[#allocation10 + $0x34] sm:$0xf]
        %v925 = vld [vmem:[#allocation10 + $0x38] sm:$0xf]
        %v926 = vld [vmem:[#allocation10 + $0x3c] sm:$0xf]
        %v927 = vld [vmem:[%s4] sm:$0x1]
        %v929 = vlaneseq
        %v930 = vshrl.u32 %v929, 7
        %v931 = vsub.s32 0, %v930
        %v932 = vrot.slane %v927, %v931
        %v950 = vunpack.c.l.b16 %v911
        %v951 = vunpack.c.l.b16 %v912
        %v952 = vunpack.c.l.b16 %v913
        %v953 = vunpack.c.l.b16 %v914
        %v954 = vunpack.c.l.b16 %v915
        %v955 = vunpack.c.l.b16 %v916
        %v956 = vunpack.c.l.b16 %v917
        %v957 = vunpack.c.l.b16 %v918
        %v958 = vunpack.c.l.b16 %v919
        %v959 = vunpack.c.l.b16 %v920
        %v960 = vunpack.c.l.b16 %v921
        %v961 = vunpack.c.l.b16 %v922
        %v962 = vunpack.c.l.b16 %v923
        %v963 = vunpack.c.l.b16 %v924
        %v964 = vunpack.c.l.b16 %v925
        %v965 = vunpack.c.l.b16 %v926
        %v966 = vpack.c.b16 %v951, %v950
        %v967 = vpack.c.b16 %v953, %v952
        %v968 = vpack.c.b16 %v955, %v954
        %v969 = vpack.c.b16 %v957, %v956
        %v970 = vpack.c.b16 %v959, %v958
        %v971 = vpack.c.b16 %v961, %v960
        %v972 = vpack.c.b16 %v963, %v962
        %v973 = vpack.c.b16 %v965, %v964
        %982 = vmatprep.subr.bf16.mxu0 0
        %983 = vmatpush1.bf16.msra.mxu0 %v973
        %984 = vmatprep.subr.bf16.mxu0 0
        %985 = vmatpush1.bf16.msra.mxu0 %v972
        %986 = vmatprep.subr.bf16.mxu0 0
        %987 = vmatpush1.bf16.msra.mxu0 %v971
        %988 = vmatprep.subr.bf16.mxu0 0
        %989 = vmatpush1.bf16.msra.mxu0 %v970
        %990 = vmatprep.subr.bf16.mxu0 0
        %991 = vmatpush1.bf16.msra.mxu0 %v969
        %992 = vmatprep.subr.bf16.mxu0 0
        %993 = vmatpush1.bf16.msra.mxu0 %v968
        %994 = vmatprep.subr.bf16.mxu0 0
        %995 = vmatpush1.bf16.msra.mxu0 %v967
        %996 = vmatprep.subr.bf16.mxu0 0
        %997 = vmatpush1.bf16.msra.mxu0 %v966
        %998 = vmatprep.subr.bf16.mxu0 0
        %999 = vmatpush2.bf16.msra.mxu0 0
        %1000 = vmatprep.subr.bf16.mxu0 0
        %1001 = vmatpush2.bf16.msra.mxu0 0
        %1002 = vmatprep.subr.bf16.mxu0 0
        %1003 = vmatpush2.bf16.msra.mxu0 0
        %1004 = vmatprep.subr.bf16.mxu0 0
        %1005 = vmatpush2.bf16.msra.mxu0 0
        %1006 = vmatprep.subr.bf16.mxu0 0
        %1007 = vmatpush2.bf16.msra.mxu0 0
        %1008 = vmatprep.subr.bf16.mxu0 0
        %1009 = vmatpush2.bf16.msra.mxu0 0
        %1010 = vmatprep.subr.bf16.mxu0 0
        %1011 = vmatpush2.bf16.msra.mxu0 0
        %1012 = vmatprep.subr.bf16.mxu0 0
        %1013 = vmatpush2.bf16.msra.mxu0 0
        %1014 = vmatprep.mubr.bf16.mxu0 0
        %1015 = vmatmul.mubr.bf16.gmra.mxu0 %v910
        %v1016 = vpop.f32.mrf.mxu0
        %v1017 = vadd.f32 %v932, %v1016
        %v1018 = vpop.f32.mrf.mxu0
        %v1019 = vpop.f32.mrf.mxu0
        %v1020 = vpop.f32.mrf.mxu0
        %1021 = vdwg.mxu0
        %v1022 = vunpack.c.l.bf16 %v804
        %v1023 = vadd.f32 %v1022, %v1017
        %v1024 = vld [vmem:[%s5] sm:$0x1]
        %v1025 = vld [vmem:[%s6] sm:$0x1]
        %1026 = vadd.xlane.f32.xlu0 %v1023
        %v1027 = vpop.xlane.xlu0 %1026
        %v1028 = vmul.f32 %v1023, %v1023
        %1029 = vadd.xlane.f32.xlu0 %v1028
        %v1030 = vpop.xlane.xlu0 %1029
        %v1031 = vmul.f32 %v1027, 0.03125
        %v1032 = vmul.f32 %v1030, 0.03125
        %v1033 = vmul.f32 %v1031, %v1031
        %v1034 = vsub.f32 %v1032, %v1033
        %v1035 = vsub.f32 %v1023, %v1031
        %v1036 = vadd.f32 %v1034, 1e-05
        %v1037 = vrsqrt.pop %v1036
        %v1038 = vmul.f32 %v1035, %v1037
        %v1040 = vlaneseq
        %v1041 = vshrl.u32 %v1040, 7
        %v1042 = vsub.s32 0, %v1041
        %v1043 = vrot.slane %v1024, %v1042
        %v1045 = vmul.f32 %v1038, %v1043
        %v1047 = vlaneseq
        %v1048 = vshrl.u32 %v1047, 7
        %v1049 = vsub.s32 0, %v1048
        %v1050 = vrot.slane %v1025, %v1049
        %v1052 = vadd.f32 %v1045, %v1050
        %v1053 = vpack.c.bf16 %v1052, %v1052
        %v1054 = vld [vmem:[#allocation11] sm:$0xf]
        %v1055 = vld [vmem:[#allocation11 + $0x4] sm:$0xf]
        %v1056 = vld [vmem:[#allocation11 + $0x8] sm:$0xf]
        %v1057 = vld [vmem:[#allocation11 + $0xc] sm:$0xf]
        %v1058 = vld [vmem:[#allocation11 + $0x10] sm:$0xf]
        %v1059 = vld [vmem:[#allocation11 + $0x14] sm:$0xf]
        %v1060 = vld [vmem:[#allocation11 + $0x18] sm:$0xf]
        %v1061 = vld [vmem:[#allocation11 + $0x1c] sm:$0xf]
        %v1062 = vld [vmem:[#allocation11 + $0x20] sm:$0xf]
        %v1063 = vld [vmem:[#allocation11 + $0x24] sm:$0xf]
        %v1064 = vld [vmem:[#allocation11 + $0x28] sm:$0xf]
        %v1065 = vld [vmem:[#allocation11 + $0x2c] sm:$0xf]
        %v1066 = vld [vmem:[#allocation11 + $0x30] sm:$0xf]
        %v1067 = vld [vmem:[#allocation11 + $0x34] sm:$0xf]
        %v1068 = vld [vmem:[#allocation11 + $0x38] sm:$0xf]
        %v1069 = vld [vmem:[#allocation11 + $0x3c] sm:$0xf]
        %v1070 = vld [vmem:[%s8] sm:$0x1]
        %v1072 = vlaneseq
        %v1073 = vshrl.u32 %v1072, 7
        %v1074 = vsub.s32 0, %v1073
        %v1075 = vrot.slane %v1070, %v1074
        %v1093 = vunpack.c.l.b16 %v1054
        %v1094 = vunpack.c.l.b16 %v1055
        %v1095 = vunpack.c.l.b16 %v1056
        %v1096 = vunpack.c.l.b16 %v1057
        %v1097 = vunpack.c.l.b16 %v1058
        %v1098 = vunpack.c.l.b16 %v1059
        %v1099 = vunpack.c.l.b16 %v1060
        %v1100 = vunpack.c.l.b16 %v1061
        %v1101 = vunpack.c.l.b16 %v1062
        %v1102 = vunpack.c.l.b16 %v1063
        %v1103 = vunpack.c.l.b16 %v1064
        %v1104 = vunpack.c.l.b16 %v1065
        %v1105 = vunpack.c.l.b16 %v1066
        %v1106 = vunpack.c.l.b16 %v1067
        %v1107 = vunpack.c.l.b16 %v1068
        %v1108 = vunpack.c.l.b16 %v1069
        %v1109 = vpack.c.b16 %v1094, %v1093
        %v1110 = vpack.c.b16 %v1096, %v1095
        %v1111 = vpack.c.b16 %v1098, %v1097
        %v1112 = vpack.c.b16 %v1100, %v1099
        %v1113 = vpack.c.b16 %v1102, %v1101
        %v1114 = vpack.c.b16 %v1104, %v1103
        %v1115 = vpack.c.b16 %v1106, %v1105
        %v1116 = vpack.c.b16 %v1108, %v1107
        %1125 = vmatprep.subr.bf16.mxu0 0
        %1126 = vmatpush1.bf16.msra.mxu0 %v1116
        %1127 = vmatprep.subr.bf16.mxu0 0
        %1128 = vmatpush1.bf16.msra.mxu0 %v1115
        %1129 = vmatprep.subr.bf16.mxu0 0
        %1130 = vmatpush1.bf16.msra.mxu0 %v1114
        %1131 = vmatprep.subr.bf16.mxu0 0
        %1132 = vmatpush1.bf16.msra.mxu0 %v1113
        %1133 = vmatprep.subr.bf16.mxu0 0
        %1134 = vmatpush1.bf16.msra.mxu0 %v1112
        %1135 = vmatprep.subr.bf16.mxu0 0
        %1136 = vmatpush1.bf16.msra.mxu0 %v1111
        %1137 = vmatprep.subr.bf16.mxu0 0
        %1138 = vmatpush1.bf16.msra.mxu0 %v1110
        %1139 = vmatprep.subr.bf16.mxu0 0
        %1140 = vmatpush1.bf16.msra.mxu0 %v1109
        %1141 = vmatprep.subr.bf16.mxu0 0
        %1142 = vmatpush2.bf16.msra.mxu0 0
        %1143 = vmatprep.subr.bf16.mxu0 0
        %1144 = vmatpush2.bf16.msra.mxu0 0
        %1145 = vmatprep.subr.bf16.mxu0 0
        %1146 = vmatpush2.bf16.msra.mxu0 0
        %1147 = vmatprep.subr.bf16.mxu0 0
        %1148 = vmatpush2.bf16.msra.mxu0 0
        %1149 = vmatprep.subr.bf16.mxu0 0
        %1150 = vmatpush2.bf16.msra.mxu0 0
        %1151 = vmatprep.subr.bf16.mxu0 0
        %1152 = vmatpush2.bf16.msra.mxu0 0
        %1153 = vmatprep.subr.bf16.mxu0 0
        %1154 = vmatpush2.bf16.msra.mxu0 0
        %1155 = vmatprep.subr.bf16.mxu0 0
        %1156 = vmatpush2.bf16.msra.mxu0 0
        %1157 = vmatprep.mubr.bf16.mxu0 0
        %1158 = vmatmul.mubr.bf16.gmra.mxu0 %v1053
        %v1159 = vpop.f32.mrf.mxu0
        %v1160 = vadd.f32 %v1075, %v1159
        %v1161 = vpop.f32.mrf.mxu0
        %v1162 = vpop.f32.mrf.mxu0
        %v1163 = vpop.f32.mrf.mxu0
        %1164 = vdwg.mxu0
        %v1165 = vmax.f32 %v1160, 0.0
        %v1166 = vpack.c.bf16 %v1165, %v1165
        %v1167 = vld [vmem:[#allocation13] sm:$0xf]
        %v1168 = vld [vmem:[#allocation13 + $0x4] sm:$0xf]
        %v1169 = vld [vmem:[#allocation13 + $0x8] sm:$0xf]
        %v1170 = vld [vmem:[#allocation13 + $0xc] sm:$0xf]
        %v1171 = vld [vmem:[#allocation13 + $0x10] sm:$0xf]
        %v1172 = vld [vmem:[#allocation13 + $0x14] sm:$0xf]
        %v1173 = vld [vmem:[#allocation13 + $0x18] sm:$0xf]
        %v1174 = vld [vmem:[#allocation13 + $0x1c] sm:$0xf]
        %v1175 = vld [vmem:[#allocation13 + $0x20] sm:$0xf]
        %v1176 = vld [vmem:[#allocation13 + $0x24] sm:$0xf]
        %v1177 = vld [vmem:[#allocation13 + $0x28] sm:$0xf]
        %v1178 = vld [vmem:[#allocation13 + $0x2c] sm:$0xf]
        %v1179 = vld [vmem:[#allocation13 + $0x30] sm:$0xf]
        %v1180 = vld [vmem:[#allocation13 + $0x34] sm:$0xf]
        %v1181 = vld [vmem:[#allocation13 + $0x38] sm:$0xf]
        %v1182 = vld [vmem:[#allocation13 + $0x3c] sm:$0xf]
        %v1183 = vld [vmem:[%s10] sm:$0x1]
        %v1185 = vlaneseq
        %v1186 = vshrl.u32 %v1185, 7
        %v1187 = vsub.s32 0, %v1186
        %v1188 = vrot.slane %v1183, %v1187
        %v1206 = vunpack.c.l.b16 %v1167
        %v1207 = vunpack.c.l.b16 %v1168
        %v1208 = vunpack.c.l.b16 %v1169
        %v1209 = vunpack.c.l.b16 %v1170
        %v1210 = vunpack.c.l.b16 %v1171
        %v1211 = vunpack.c.l.b16 %v1172
        %v1212 = vunpack.c.l.b16 %v1173
        %v1213 = vunpack.c.l.b16 %v1174
        %v1214 = vunpack.c.l.b16 %v1175
        %v1215 = vunpack.c.l.b16 %v1176
        %v1216 = vunpack.c.l.b16 %v1177
        %v1217 = vunpack.c.l.b16 %v1178
        %v1218 = vunpack.c.l.b16 %v1179
        %v1219 = vunpack.c.l.b16 %v1180
        %v1220 = vunpack.c.l.b16 %v1181
        %v1221 = vunpack.c.l.b16 %v1182
        %v1222 = vpack.c.b16 %v1207, %v1206
        %v1223 = vpack.c.b16 %v1209, %v1208
        %v1224 = vpack.c.b16 %v1211, %v1210
        %v1225 = vpack.c.b16 %v1213, %v1212
        %v1226 = vpack.c.b16 %v1215, %v1214
        %v1227 = vpack.c.b16 %v1217, %v1216
        %v1228 = vpack.c.b16 %v1219, %v1218
        %v1229 = vpack.c.b16 %v1221, %v1220
        %1238 = vmatprep.subr.bf16.mxu0 0
        %1239 = vmatpush1.bf16.msra.mxu0 %v1229
        %1240 = vmatprep.subr.bf16.mxu0 0
        %1241 = vmatpush1.bf16.msra.mxu0 %v1228
        %1242 = vmatprep.subr.bf16.mxu0 0
        %1243 = vmatpush1.bf16.msra.mxu0 %v1227
        %1244 = vmatprep.subr.bf16.mxu0 0
        %1245 = vmatpush1.bf16.msra.mxu0 %v1226
        %1246 = vmatprep.subr.bf16.mxu0 0
        %1247 = vmatpush1.bf16.msra.mxu0 %v1225
        %1248 = vmatprep.subr.bf16.mxu0 0
        %1249 = vmatpush1.bf16.msra.mxu0 %v1224
        %1250 = vmatprep.subr.bf16.mxu0 0
        %1251 = vmatpush1.bf16.msra.mxu0 %v1223
        %1252 = vmatprep.subr.bf16.mxu0 0
        %1253 = vmatpush1.bf16.msra.mxu0 %v1222
        %1254 = vmatprep.subr.bf16.mxu0 0
        %1255 = vmatpush2.bf16.msra.mxu0 0
        %1256 = vmatprep.subr.bf16.mxu0 0
        %1257 = vmatpush2.bf16.msra.mxu0 0
        %1258 = vmatprep.subr.bf16.mxu0 0
        %1259 = vmatpush2.bf16.msra.mxu0 0
        %1260 = vmatprep.subr.bf16.mxu0 0
        %1261 = vmatpush2.bf16.msra.mxu0 0
        %1262 = vmatprep.subr.bf16.mxu0 0
        %1263 = vmatpush2.bf16.msra.mxu0 0
        %1264 = vmatprep.subr.bf16.mxu0 0
        %1265 = vmatpush2.bf16.msra.mxu0 0
        %1266 = vmatprep.subr.bf16.mxu0 0
        %1267 = vmatpush2.bf16.msra.mxu0 0
        %1268 = vmatprep.subr.bf16.mxu0 0
        %1269 = vmatpush2.bf16.msra.mxu0 0
        %1270 = vmatprep.mubr.bf16.mxu0 0
        %1271 = vmatmul.mubr.bf16.gmra.mxu0 %v1166
        %v1272 = vpop.f32.mrf.mxu0
        %v1273 = vadd.f32 %v1188, %v1272
        %v1274 = vpop.f32.mrf.mxu0
        %v1275 = vpop.f32.mrf.mxu0
        %v1276 = vpop.f32.mrf.mxu0
        %1277 = vdwg.mxu0
        %v1278 = vadd.f32 %v1052, %v1273
        %v1279 = vld [vmem:[%s11] sm:$0x1]
        %v1280 = vld [vmem:[%s12] sm:$0x1]
        %1281 = vadd.xlane.f32.xlu0 %v1278
        %v1282 = vpop.xlane.xlu0 %1281
        %v1283 = vmul.f32 %v1278, %v1278
        %1284 = vadd.xlane.f32.xlu0 %v1283
        %v1285 = vpop.xlane.xlu0 %1284
        %v1286 = vmul.f32 %v1282, 0.03125
        %v1287 = vmul.f32 %v1285, 0.03125
        %v1288 = vmul.f32 %v1286, %v1286
        %v1289 = vsub.f32 %v1287, %v1288
        %v1290 = vsub.f32 %v1278, %v1286
        %v1291 = vadd.f32 %v1289, 1e-05
        %v1292 = vrsqrt.pop %v1291
        %v1293 = vmul.f32 %v1290, %v1292
        %v1295 = vlaneseq
        %v1296 = vshrl.u32 %v1295, 7
        %v1297 = vsub.s32 0, %v1296
        %v1298 = vrot.slane %v1279, %v1297
        %v1300 = vmul.f32 %v1293, %v1298
        %v1302 = vlaneseq
        %v1303 = vshrl.u32 %v1302, 7
        %v1304 = vsub.s32 0, %v1303
        %v1305 = vrot.slane %v1280, %v1304
        %v1307 = vadd.f32 %v1300, %v1305
        %1308 = vst [vmem:[%s527] sm:$0xff] %v1307
        %s1309 = sand.u32 %s332, 1
        %s1310 = scalar_lea.sflag [#allocation7], %s1309
        %s1311 = sand.u32 %s332, 1
        %s1312 = smul.addr %s1311, 8
        %s1313 = scalar_lea.vmem [#allocation14], %s1312
        // Predicated region
        $region97: #{tpu_custom_call.1} parent=71 // pred_check
          %p1314 = pneg %p342
        $region98: #{tpu_custom_call.1} parent=71 // pred_check_branch
          %1316 = sbr.rel (%p1314) target = $region100
        $region99: #{tpu_custom_call.1} parent=71 // pred_region
          %s1318 = ssub.s32 128, 128
          %1319 = vsyncadd %s1310, %s1318
          %s1320 = sadd.s32 %s37, %s36
          %s1321 = smul.addr %s1320, 128
          %s1322 = scalar_lea.hbm %s13, %s1321
          %s1324 = sshll.u32 %s1313, 4
          %s1325 = int_to_ptr.vmem [resolvable:$true] %s1324
          %1327 = dma.vmem_to_hbm [thread:$0]  %s1325, 128, %s1322, %s1310
        $region100: #{tpu_custom_call.1} parent=71 // pred_fallthru
          _
      $region72: #{tpu_custom_call.1} parent=5 // pred_fallthru
        _
      %p1328 = scmp.le.s32.totalorder 2, %s27
      // Predicated region
      $region101: #{tpu_custom_call.1} parent=5 // pred_check
        %p1329 = pneg %p1328
      $region102: #{tpu_custom_call.1} parent=5 // pred_check_branch
        %1331 = sbr.rel (%p1329) target = $region104
      $region103: #{tpu_custom_call.1} parent=5 // pred_region
        %s1332 = ssub.s32 %s27, 2
        // Predicated region
        $region105: #{tpu_custom_call.1} parent=103 // pred_check
          %p1333 = pneg %p348
        $region106: #{tpu_custom_call.1} parent=103 // pred_check_branch
          %1335 = sbr.rel (%p1333) target = $region108
        $region107: #{tpu_custom_call.1} parent=103 // pred_region
          %s1336 = sand.u32 %s333, 1
          %s1337 = scalar_lea.sflag [#allocation7], %s1336
          %s1338 = sand.u32 %s333, 1
          %s1339 = smul.addr %s1338, 8
          %s1340 = scalar_lea.vmem [#allocation14], %s1339
          %1341 = dma.done %s1337, 128
        $region108: #{tpu_custom_call.1} parent=103 // pred_fallthru
          _
      $region104: #{tpu_custom_call.1} parent=5 // pred_fallthru
        _
    $region6: #{tpu_custom_call.1} parent=1 // loop_footer
      %s31 = sadd.s32 1, %s27
    $region7: #{tpu_custom_call.1} parent=1 // loop_footer_branch
      %26 = sbr.rel target = $region3
    $region8: #{tpu_custom_call.1} parent=1 // loop_exit
      _
    %1342 = vsyncpa [#allocation6], 1
    %s1343 = scalar_lea.sflag [#allocation6], 1
    %1344 = vsyncpa %s1343, 1
    %1345 = vsyncpa [#allocation9], 1
    %1346 = vsyncpa [#allocation12], 1
    %1347 = vsyncpa [#allocation7], 1
    %s1348 = scalar_lea.sflag [#allocation7], 1
    %1349 = vsyncpa %s1348, 1

</llo_original>
